<compile_context>
chip_gen: v5e
topology: v5e:2x2
jax: 0.10.0
libtpu: 0.0.40
codegen_flags: <defaults>
</compile_context>

<pallas_src>
import jax
import jax.numpy as jnp
from jax.experimental import pallas as pl
from jax.experimental.pallas import tpu as pltpu

IN_PAD = 8       # in_features (5) padded to the sublane granule
HID = 64         # logical hidden width
HID_PAD = 128    # hidden padded to a full lane/sublane tile (keeps ops unmasked)
TB_MAX = 1024    # batch-tile size (multiple of 128); bounds VMEM independent of B
EPS = 1e-5


def _make_kernel(batch, tile_b):
    """3-pass kernel, closed over the static batch size and tile size."""
    inv_n = 1.0 / float(batch)

    def kernel(xT_ref, w1T_ref, w2T_ref, vec_ref, o_ref, stats_ref):
        p = pl.program_id(0)            # pass: 0 = BN1 stats, 1 = BN2 stats, 2 = apply
        t = pl.program_id(1)            # batch tile
        nt = pl.num_programs(1)

        # Packed small vectors, one column each (padded rows 64:128 are zero).
        v = vec_ref[...]                                    # (128, 8) f32
        b1c, g1c, be1c = v[:, 0:1], v[:, 1:2], v[:, 2:3]
        b2c, g2c, be2c = v[:, 3:4], v[:, 4:5], v[:, 5:6]
        w3c = v[:, 6:7]                                     # Linear(64->1) weights
        b3 = v[0:1, 7:8]                                    # its bias (scalar)

        # Lanes of this tile that are real batch columns (tail tile is padded).
        lane = jax.lax.broadcasted_iota(jnp.int32, (1, tile_b), 1)
        valid = ((t * tile_b + lane) < batch).astype(jnp.float32)   # (1, TB)

        # ---- Linear(5->64, padded 8->128) + ReLU, feature-major (every pass) ----
        h1 = jnp.maximum(
            jnp.dot(w1T_ref[...], xT_ref[...],
                    preferred_element_type=jnp.float32) + b1c, 0.0)  # (128, TB) f32

        def layer2(h):
            # Fused BN1 apply (scale/shift) + Linear(64->64) + ReLU.
            a1 = stats_ref[:, 2:3]
            s1 = stats_ref[:, 3:4]
            hn = (h * a1 + s1).astype(jnp.bfloat16)
            return jnp.maximum(
                jnp.dot(w2T_ref[...], hn,
                        preferred_element_type=jnp.float32) + b2c, 0.0)

        # ---------------- pass 0: whole-batch stats of h1 ----------------
        @pl.when(p == 0)
        def _():
            @pl.when(t == 0)
            def _():
                stats_ref[...] = jnp.zeros_like(stats_ref)
            hm = h1 * valid
            stats_ref[:, 0:1] += jnp.sum(hm, axis=1, keepdims=True)
            stats_ref[:, 1:2] += jnp.sum(hm * hm, axis=1, keepdims=True)

            @pl.when(t == nt - 1)            # fold stats into fused scale/shift
            def _():
                mu = stats_ref[:, 0:1] * inv_n
                var = jnp.maximum(stats_ref[:, 1:2] * inv_n - mu * mu, 0.0)
                a = g1c * jax.lax.rsqrt(var + EPS)
                stats_ref[:, 2:3] = a
                stats_ref[:, 3:4] = be1c - mu * a

        # ---------------- pass 1: whole-batch stats of h2 ----------------
        @pl.when(p == 1)
        def _():
            h2 = layer2(h1)
            hm = h2 * valid
            stats_ref[:, 4:5] += jnp.sum(hm, axis=1, keepdims=True)
            stats_ref[:, 5:6] += jnp.sum(hm * hm, axis=1, keepdims=True)

            @pl.when(t == nt - 1)
            def _():
                mu = stats_ref[:, 4:5] * inv_n
                var = jnp.maximum(stats_ref[:, 5:6] * inv_n - mu * mu, 0.0)
                a = g2c * jax.lax.rsqrt(var + EPS)
                stats_ref[:, 6:7] = a
                stats_ref[:, 7:8] = be2c - mu * a

        # -------- pass 2: apply BN2 + Linear(64->1), batch-packed store --------
        @pl.when(p == 2)
        def _():
            h2 = layer2(h1)
            h2n = h2 * stats_ref[:, 6:7] + stats_ref[:, 7:8]
            # Final layer as a w3-weighted sublane reduction: the (1, TB) result
            # is already packed 128 batch rows per lane row -> unmasked, fully
            # dense output store, no dead lanes, no (TB,128) temporary.
            o_ref[...] = jnp.sum(h2n * w3c, axis=0, keepdims=True) + b3

    return kernel


def net_forward(x, params):
    B, F = x.shape
    assert F <= IN_PAD
    tile_b = TB_MAX if B >= TB_MAX else 128 * pl.cdiv(B, 128)
    nt = pl.cdiv(B, tile_b)
    b_pad = nt * tile_b

    # Feature-major, feature/batch-padded, bf16 input — one fused XLA op
    # (transpose + pad + cast).  Padded columns are zero; they are masked out of
    # the BN statistics inside the kernel and sliced off below.
    xT = jnp.zeros((IN_PAD, b_pad), jnp.bfloat16)
    xT = xT.at[:F, :B].set(x.T.astype(jnp.bfloat16))

    out_row = pl.pallas_call(
        _make_kernel(B, tile_b),
        out_shape=jax.ShapeDtypeStruct((1, b_pad), jnp.float32),
        grid_spec=pltpu.PrefetchScalarGridSpec(
            num_scalar_prefetch=0,
            grid=(3, nt),                                   # (BN pass, batch tile)
            in_specs=[
                pl.BlockSpec((IN_PAD, tile_b), lambda p, t: (0, t)),   # x^T tile
                pl.BlockSpec((HID_PAD, IN_PAD), lambda p, t: (0, 0)),  # W1^T (whole)
                pl.BlockSpec((HID_PAD, HID_PAD), lambda p, t: (0, 0)), # W2^T (whole)
                pl.BlockSpec((HID_PAD, 8), lambda p, t: (0, 0)),       # packed vecs
            ],
            out_specs=pl.BlockSpec((1, tile_b), lambda p, t: (0, t)),
            # sum1 | sumsq1 | a1 | b1 | sum2 | sumsq2 | a2 | b2  (one column each)
            scratch_shapes=[pltpu.VMEM((HID_PAD, 8), jnp.float32)],
        ),
        compiler_params=pltpu.CompilerParams(
            dimension_semantics=("arbitrary", "arbitrary"),  # stats carry across tiles/passes
            vmem_limit_bytes=32 * 1024 * 1024,
        ),
    )(xT, params["w1pT"], params["w2pT"], params["vecs"])

    # Packed lanes -> (B, 1): lane j of the single output row is batch row j.
    return out_row[0, :B].reshape(B, 1)


def init_params(key, in_features=5, hidden=HID):
    ks = jax.random.split(key, 3)

    def lin_init(k, fan_in, fan_out):
        # Same uniform bound as PyTorch Linear default init.
        bound = 1.0 / jnp.sqrt(jnp.float32(fan_in))
        kw, kb = jax.random.split(k)
        w = jax.random.uniform(kw, (fan_in, fan_out), jnp.float32, -bound, bound)
        b = jax.random.uniform(kb, (fan_out,), jnp.float32, -bound, bound)
        return w, b

    w1, b1 = lin_init(ks[0], in_features, hidden)
    w2, b2 = lin_init(ks[1], hidden, hidden)
    w3, b3 = lin_init(ks[2], hidden, 1)
    g1 = jnp.ones((hidden,), jnp.float32)
    be1 = jnp.zeros((hidden,), jnp.float32)
    g2 = jnp.ones((hidden,), jnp.float32)
    be2 = jnp.zeros((hidden,), jnp.float32)

    # ---- pack into padded, feature-major layouts ----
    w1pT = jnp.zeros((HID_PAD, IN_PAD), jnp.float32).at[:hidden, :in_features].set(w1.T)
    w2pT = jnp.zeros((HID_PAD, HID_PAD), jnp.float32).at[:hidden, :hidden].set(w2.T)

    vecs = jnp.zeros((HID_PAD, 8), jnp.float32)
    vecs = vecs.at[:hidden, 0].set(b1)
    vecs = vecs.at[:hidden, 1].set(g1)
    vecs = vecs.at[:hidden, 2].set(be1)
    vecs = vecs.at[:hidden, 3].set(b2)
    vecs = vecs.at[:hidden, 4].set(g2)
    vecs = vecs.at[:hidden, 5].set(be2)
    vecs = vecs.at[:hidden, 6].set(w3[:, 0])   # w3 column
    vecs = vecs.at[:, 7].set(b3[0])            # b3 (broadcast, read as scalar)

    raw = dict(w1=w1, b1=b1, w2=w2, b2=b2, w3=w3, b3=b3,
               g1=g1, be1=be1, g2=g2, be2=be2)
    return dict(w1pT=w1pT.astype(jnp.bfloat16),
                w2pT=w2pT.astype(jnp.bfloat16),
                vecs=vecs, raw=raw)


def net_ref(x, raw):
    """Pure-JAX reference with the kernel's precision choices (bf16 MXU inputs
    for the first two matmuls, f32 elsewhere, fused BN scale/shift)."""
    def mm_bf16(h, w):
        return jnp.dot(h.astype(jnp.bfloat16), w.astype(jnp.bfloat16),
                       preferred_element_type=jnp.float32)

    def bn(h, g, be):
        mu = jnp.mean(h, axis=0, keepdims=True)
        var = jnp.maximum(jnp.mean(h * h, axis=0, keepdims=True) - mu * mu, 0.0)
        a = g * jax.lax.rsqrt(var + EPS)
        return h * a + (be - mu * a)

    h = jnp.maximum(mm_bf16(x, raw["w1"]) + raw["b1"], 0.0)
    h = bn(h, raw["g1"], raw["be1"])
    h = jnp.maximum(mm_bf16(h, raw["w2"]) + raw["b2"], 0.0)
    h = bn(h, raw["g2"], raw["be2"])
    return jnp.dot(h, raw["w3"]) + raw["b3"]


if __name__ == "__main__":
    key = jax.random.PRNGKey(0)
    k_x, k_p = jax.random.split(key)

    B, F = 8, 5
    x = jax.random.normal(k_x, (B, F), jnp.float32)
    params = init_params(k_p, in_features=F, hidden=HID)

    out = net_forward(x, params)
    jax.block_until_ready(out)
    assert out.shape == (B, 1), out.shape
    assert bool(jnp.all(jnp.isfinite(out)))

    ref = net_ref(x, params["raw"])
    assert bool(jnp.allclose(out, ref, atol=2e-2, rtol=2e-2)), (out, ref)
    print("KERNEL_OK")
</pallas_src>

<mosaic_0001>
module attributes {stable_mosaic.version = 11 : i64} {
  func.func @kernel(%arg0: i32, %arg1: i32, %arg2: memref<8x128xbf16, #tpu.memory_space<vmem>>, %arg3: memref<128x8xbf16, #tpu.memory_space<vmem>>, %arg4: memref<128x128xbf16, #tpu.memory_space<vmem>>, %arg5: memref<128x8xf32, #tpu.memory_space<vmem>>, %arg6: memref<1x128xf32, #tpu.memory_space<vmem>>, %arg7: memref<128x8xf32, #tpu.memory_space<vmem>>) attributes {dimension_semantics = [#tpu.dimension_semantics<arbitrary>, #tpu.dimension_semantics<arbitrary>], iteration_bounds = array<i64: 3, 1>, scalar_prefetch = 0 : i64, scratch_operands = 1 : i64, tpu.core_type = #tpu.core_type<tc>, window_params = [{transform_indices = @transform_0, window_bounds = array<i64: 8, 128>}, {pipeline_mode = #tpu.pipeline_mode<synchronous>, transform_indices = @transform_1, window_bounds = array<i64: 128, 8>}, {pipeline_mode = #tpu.pipeline_mode<synchronous>, transform_indices = @transform_2, window_bounds = array<i64: 128, 128>}, {pipeline_mode = #tpu.pipeline_mode<synchronous>, transform_indices = @transform_3, window_bounds = array<i64: 128, 8>}, {transform_indices = @transform_4, window_bounds = array<i64: 1, 128>}]} {
    %c0 = arith.constant 0 : index
    %c0_0 = arith.constant 0 : index
    %0 = vector.load %arg5[%c0, %c0_0] : memref<128x8xf32, #tpu.memory_space<vmem>>, vector<128x8xf32>
    %1 = vector.extract_strided_slice %0 {offsets = [0, 0], sizes = [128, 1], strides = [1, 1]} : vector<128x8xf32> to vector<128x1xf32>
    %2 = vector.extract_strided_slice %0 {offsets = [0, 1], sizes = [128, 1], strides = [1, 1]} : vector<128x8xf32> to vector<128x1xf32>
    %3 = vector.extract_strided_slice %0 {offsets = [0, 2], sizes = [128, 1], strides = [1, 1]} : vector<128x8xf32> to vector<128x1xf32>
    %4 = vector.extract_strided_slice %0 {offsets = [0, 3], sizes = [128, 1], strides = [1, 1]} : vector<128x8xf32> to vector<128x1xf32>
    %5 = vector.extract_strided_slice %0 {offsets = [0, 4], sizes = [128, 1], strides = [1, 1]} : vector<128x8xf32> to vector<128x1xf32>
    %6 = vector.extract_strided_slice %0 {offsets = [0, 5], sizes = [128, 1], strides = [1, 1]} : vector<128x8xf32> to vector<128x1xf32>
    %7 = vector.extract_strided_slice %0 {offsets = [0, 6], sizes = [128, 1], strides = [1, 1]} : vector<128x8xf32> to vector<128x1xf32>
    %8 = vector.extract_strided_slice %0 {offsets = [0, 7], sizes = [1, 1], strides = [1, 1]} : vector<128x8xf32> to vector<1x1xf32>
    %9 = tpu.iota {dimensions = array<i32: 1>} : vector<1x128xi32>
    %c128_i32 = arith.constant 128 : i32
    %10 = arith.muli %arg1, %c128_i32 : i32
    %11 = vector.broadcast %10 : i32 to vector<1x128xi32>
    %12 = arith.addi %11, %9 : vector<1x128xi32>
    %c8_i32 = arith.constant 8 : i32
    %13 = vector.broadcast %c8_i32 : i32 to vector<1x128xi32>
    %14 = arith.cmpi slt, %12, %13 : vector<1x128xi32>
    %15 = arith.extui %14 : vector<1x128xi1> to vector<1x128xi32>
    %16 = arith.sitofp %15 : vector<1x128xi32> to vector<1x128xf32>
    %c0_1 = arith.constant 0 : index
    %c0_2 = arith.constant 0 : index
    %17 = vector.load %arg3[%c0_1, %c0_2] : memref<128x8xbf16, #tpu.memory_space<vmem>>, vector<128x8xbf16>
    %c0_3 = arith.constant 0 : index
    %c0_4 = arith.constant 0 : index
    %18 = vector.load %arg2[%c0_3, %c0_4] : memref<8x128xbf16, #tpu.memory_space<vmem>>, vector<8x128xbf16>
    %cst = arith.constant dense<0.000000e+00> : vector<128x128xf32>
    %19 = tpu.matmul %17, %18, %cst {dimension_numbers = #tpu.dot_dimension_numbers<[1], [0], [0], [1], [0, 0, 1, 1], [], []>} : vector<128x8xbf16>, vector<8x128xbf16>, vector<128x128xf32> -> vector<128x128xf32>
    %20 = vector.broadcast %1 : vector<128x1xf32> to vector<128x128xf32>
    %21 = arith.addf %19, %20 : vector<128x128xf32>
    %cst_5 = arith.constant 0.000000e+00 : f32
    %22 = vector.broadcast %cst_5 : f32 to vector<128x128xf32>
    %23 = arith.maximumf %21, %22 : vector<128x128xf32>
    %c0_i32 = arith.constant 0 : i32
    %24 = arith.cmpi eq, %arg0, %c0_i32 : i32
    %25 = arith.extui %24 : i1 to i32
    %c0_i32_6 = arith.constant 0 : i32
    %26 = arith.cmpi ne, %25, %c0_i32_6 : i32
    scf.if %26 {
      %c0_i32_9 = arith.constant 0 : i32
      %33 = arith.cmpi eq, %arg1, %c0_i32_9 : i32
      %34 = arith.extui %33 : i1 to i32
      %c0_i32_10 = arith.constant 0 : i32
      %35 = arith.cmpi ne, %34, %c0_i32_10 : i32
      scf.if %35 {
        %cst_22 = arith.constant 0.000000e+00 : f32
        %52 = vector.broadcast %cst_22 : f32 to vector<128x8xf32>
        %c0_23 = arith.constant 0 : index
        %c0_24 = arith.constant 0 : index
        %53 = vector.load %arg7[%c0_23, %c0_24] : memref<128x8xf32, #tpu.memory_space<vmem>>, vector<128x8xf32>
        tpu.vector_store %arg7[%c0_23, %c0_24], %52 {strides = array<i32>} : memref<128x8xf32, #tpu.memory_space<vmem>>, vector<128x8xf32>,
      } else {
      }
      %36 = vector.broadcast %16 : vector<1x128xf32> to vector<128x128xf32>
      %37 = arith.mulf %23, %36 : vector<128x128xf32>
      %c0_11 = arith.constant 0 : index
      %c0_12 = arith.constant 0 : index
      %38 = vector.load %arg7[%c0_11, %c0_12] : memref<128x8xf32, #tpu.memory_space<vmem>>, vector<128x1xf32>
      %cst_13 = arith.constant dense<0.000000e+00> : vector<128xf32>
      %39 = vector.multi_reduction <add>, %37, %cst_13 [1] : vector<128x128xf32> to vector<128xf32>
      %40 = vector.shape_cast %39 : vector<128xf32> to vector<128x1xf32>
      %41 = arith.addf %38, %40 : vector<128x1xf32>
      %c0_14 = arith.constant 0 : index
      %c0_15 = arith.constant 0 : index
      %42 = vector.load %arg7[%c0_14, %c0_15] : memref<128x8xf32, #tpu.memory_space<vmem>>, vector<128x1xf32>
      tpu.vector_store %arg7[%c0_14, %c0_15], %41 {strides = array<i32>} : memref<128x8xf32, #tpu.memory_space<vmem>>, vector<128x1xf32>,
      %c0_16 = arith.constant 0 : index
      %c1 = arith.constant 1 : index
      %43 = vector.load %arg7[%c0_16, %c1] : memref<128x8xf32, #tpu.memory_space<vmem>>, vector<128x1xf32>
      %44 = arith.mulf %37, %37 : vector<128x128xf32>
      %cst_17 = arith.constant dense<0.000000e+00> : vector<128xf32>
      %45 = vector.multi_reduction <add>, %44, %cst_17 [1] : vector<128x128xf32> to vector<128xf32>
      %46 = vector.shape_cast %45 : vector<128xf32> to vector<128x1xf32>
      %47 = arith.addf %43, %46 : vector<128x1xf32>
      %c0_18 = arith.constant 0 : index
      %c1_19 = arith.constant 1 : index
      %48 = vector.load %arg7[%c0_18, %c1_19] : memref<128x8xf32, #tpu.memory_space<vmem>>, vector<128x1xf32>
      tpu.vector_store %arg7[%c0_18, %c1_19], %47 {strides = array<i32>} : memref<128x8xf32, #tpu.memory_space<vmem>>, vector<128x1xf32>,
      %c0_i32_20 = arith.constant 0 : i32
      %49 = arith.cmpi eq, %arg1, %c0_i32_20 : i32
      %50 = arith.extui %49 : i1 to i32
      %c0_i32_21 = arith.constant 0 : i32
      %51 = arith.cmpi ne, %50, %c0_i32_21 : i32
      scf.if %51 {
        %c0_22 = arith.constant 0 : index
        %c0_23 = arith.constant 0 : index
        %52 = vector.load %arg7[%c0_22, %c0_23] : memref<128x8xf32, #tpu.memory_space<vmem>>, vector<128x1xf32>
        %cst_24 = arith.constant 1.250000e-01 : f32
        %53 = vector.broadcast %cst_24 : f32 to vector<128x1xf32>
        %54 = arith.mulf %52, %53 : vector<128x1xf32>
        %c0_25 = arith.constant 0 : index
        %c1_26 = arith.constant 1 : index
        %55 = vector.load %arg7[%c0_25, %c1_26] : memref<128x8xf32, #tpu.memory_space<vmem>>, vector<128x1xf32>
        %cst_27 = arith.constant 1.250000e-01 : f32
        %56 = vector.broadcast %cst_27 : f32 to vector<128x1xf32>
        %57 = arith.mulf %55, %56 : vector<128x1xf32>
        %58 = arith.mulf %54, %54 : vector<128x1xf32>
        %59 = arith.subf %57, %58 : vector<128x1xf32>
        %cst_28 = arith.constant 0.000000e+00 : f32
        %60 = vector.broadcast %cst_28 : f32 to vector<128x1xf32>
        %61 = arith.maximumf %59, %60 : vector<128x1xf32>
        %cst_29 = arith.constant 9.99999974E-6 : f32
        %62 = vector.broadcast %cst_29 : f32 to vector<128x1xf32>
        %63 = arith.addf %61, %62 : vector<128x1xf32>
        %64 = math.rsqrt %63 : vector<128x1xf32>
        %65 = arith.mulf %2, %64 : vector<128x1xf32>
        %c0_30 = arith.constant 0 : index
        %c2 = arith.constant 2 : index
        %66 = vector.load %arg7[%c0_30, %c2] : memref<128x8xf32, #tpu.memory_space<vmem>>, vector<128x1xf32>
        tpu.vector_store %arg7[%c0_30, %c2], %65 {strides = array<i32>} : memref<128x8xf32, #tpu.memory_space<vmem>>, vector<128x1xf32>,
        %67 = arith.mulf %54, %65 : vector<128x1xf32>
        %68 = arith.subf %3, %67 : vector<128x1xf32>
        %c0_31 = arith.constant 0 : index
        %c3 = arith.constant 3 : index
        %69 = vector.load %arg7[%c0_31, %c3] : memref<128x8xf32, #tpu.memory_space<vmem>>, vector<128x1xf32>
        tpu.vector_store %arg7[%c0_31, %c3], %68 {strides = array<i32>} : memref<128x8xf32, #tpu.memory_space<vmem>>, vector<128x1xf32>,
      } else {
      }
    } else {
    }
    %c1_i32 = arith.constant 1 : i32
    %27 = arith.cmpi eq, %arg0, %c1_i32 : i32
    %28 = arith.extui %27 : i1 to i32
    %c0_i32_7 = arith.constant 0 : i32
    %29 = arith.cmpi ne, %28, %c0_i32_7 : i32
    scf.if %29 {
      %c0_9 = arith.constant 0 : index
      %c2 = arith.constant 2 : index
      %33 = vector.load %arg7[%c0_9, %c2] : memref<128x8xf32, #tpu.memory_space<vmem>>, vector<128x1xf32>
      %c0_10 = arith.constant 0 : index
      %c3 = arith.constant 3 : index
      %34 = vector.load %arg7[%c0_10, %c3] : memref<128x8xf32, #tpu.memory_space<vmem>>, vector<128x1xf32>
      %35 = vector.broadcast %33 : vector<128x1xf32> to vector<128x128xf32>
      %36 = arith.mulf %23, %35 : vector<128x128xf32>
      %37 = vector.broadcast %34 : vector<128x1xf32> to vector<128x128xf32>
      %38 = arith.addf %36, %37 : vector<128x128xf32>
      %39 = arith.truncf %38 : vector<128x128xf32> to vector<128x128xbf16>
      %c0_11 = arith.constant 0 : index
      %c0_12 = arith.constant 0 : index
      %40 = vector.load %arg4[%c0_11, %c0_12] : memref<128x128xbf16, #tpu.memory_space<vmem>>, vector<128x128xbf16>
      %cst_13 = arith.constant dense<0.000000e+00> : vector<128x128xf32>
      %41 = tpu.matmul %40, %39, %cst_13 {dimension_numbers = #tpu.dot_dimension_numbers<[1], [0], [0], [1], [0, 0, 1, 1], [], []>} : vector<128x128xbf16>, vector<128x128xbf16>, vector<128x128xf32> -> vector<128x128xf32>
      %42 = vector.broadcast %4 : vector<128x1xf32> to vector<128x128xf32>
      %43 = arith.addf %41, %42 : vector<128x128xf32>
      %cst_14 = arith.constant 0.000000e+00 : f32
      %44 = vector.broadcast %cst_14 : f32 to vector<128x128xf32>
      %45 = arith.maximumf %43, %44 : vector<128x128xf32>
      %46 = vector.broadcast %16 : vector<1x128xf32> to vector<128x128xf32>
      %47 = arith.mulf %45, %46 : vector<128x128xf32>
      %c0_15 = arith.constant 0 : index
      %c4 = arith.constant 4 : index
      %48 = vector.load %arg7[%c0_15, %c4] : memref<128x8xf32, #tpu.memory_space<vmem>>, vector<128x1xf32>
      %cst_16 = arith.constant dense<0.000000e+00> : vector<128xf32>
      %49 = vector.multi_reduction <add>, %47, %cst_16 [1] : vector<128x128xf32> to vector<128xf32>
      %50 = vector.shape_cast %49 : vector<128xf32> to vector<128x1xf32>
      %51 = arith.addf %48, %50 : vector<128x1xf32>
      %c0_17 = arith.constant 0 : index
      %c4_18 = arith.constant 4 : index
      %52 = vector.load %arg7[%c0_17, %c4_18] : memref<128x8xf32, #tpu.memory_space<vmem>>, vector<128x1xf32>
      tpu.vector_store %arg7[%c0_17, %c4_18], %51 {strides = array<i32>} : memref<128x8xf32, #tpu.memory_space<vmem>>, vector<128x1xf32>,
      %c0_19 = arith.constant 0 : index
      %c5 = arith.constant 5 : index
      %53 = vector.load %arg7[%c0_19, %c5] : memref<128x8xf32, #tpu.memory_space<vmem>>, vector<128x1xf32>
      %54 = arith.mulf %47, %47 : vector<128x128xf32>
      %cst_20 = arith.constant dense<0.000000e+00> : vector<128xf32>
      %55 = vector.multi_reduction <add>, %54, %cst_20 [1] : vector<128x128xf32> to vector<128xf32>
      %56 = vector.shape_cast %55 : vector<128xf32> to vector<128x1xf32>
      %57 = arith.addf %53, %56 : vector<128x1xf32>
      %c0_21 = arith.constant 0 : index
      %c5_22 = arith.constant 5 : index
      %58 = vector.load %arg7[%c0_21, %c5_22] : memref<128x8xf32, #tpu.memory_space<vmem>>, vector<128x1xf32>
      tpu.vector_store %arg7[%c0_21, %c5_22], %57 {strides = array<i32>} : memref<128x8xf32, #tpu.memory_space<vmem>>, vector<128x1xf32>,
      %c0_i32_23 = arith.constant 0 : i32
      %59 = arith.cmpi eq, %arg1, %c0_i32_23 : i32
      %60 = arith.extui %59 : i1 to i32
      %c0_i32_24 = arith.constant 0 : i32
      %61 = arith.cmpi ne, %60, %c0_i32_24 : i32
      scf.if %61 {
        %c0_25 = arith.constant 0 : index
        %c4_26 = arith.constant 4 : index
        %62 = vector.load %arg7[%c0_25, %c4_26] : memref<128x8xf32, #tpu.memory_space<vmem>>, vector<128x1xf32>
        %cst_27 = arith.constant 1.250000e-01 : f32
        %63 = vector.broadcast %cst_27 : f32 to vector<128x1xf32>
        %64 = arith.mulf %62, %63 : vector<128x1xf32>
        %c0_28 = arith.constant 0 : index
        %c5_29 = arith.constant 5 : index
        %65 = vector.load %arg7[%c0_28, %c5_29] : memref<128x8xf32, #tpu.memory_space<vmem>>, vector<128x1xf32>
        %cst_30 = arith.constant 1.250000e-01 : f32
        %66 = vector.broadcast %cst_30 : f32 to vector<128x1xf32>
        %67 = arith.mulf %65, %66 : vector<128x1xf32>
        %68 = arith.mulf %64, %64 : vector<128x1xf32>
        %69 = arith.subf %67, %68 : vector<128x1xf32>
        %cst_31 = arith.constant 0.000000e+00 : f32
        %70 = vector.broadcast %cst_31 : f32 to vector<128x1xf32>
        %71 = arith.maximumf %69, %70 : vector<128x1xf32>
        %cst_32 = arith.constant 9.99999974E-6 : f32
        %72 = vector.broadcast %cst_32 : f32 to vector<128x1xf32>
        %73 = arith.addf %71, %72 : vector<128x1xf32>
        %74 = math.rsqrt %73 : vector<128x1xf32>
        %75 = arith.mulf %5, %74 : vector<128x1xf32>
        %c0_33 = arith.constant 0 : index
        %c6 = arith.constant 6 : index
        %76 = vector.load %arg7[%c0_33, %c6] : memref<128x8xf32, #tpu.memory_space<vmem>>, vector<128x1xf32>
        tpu.vector_store %arg7[%c0_33, %c6], %75 {strides = array<i32>} : memref<128x8xf32, #tpu.memory_space<vmem>>, vector<128x1xf32>,
        %77 = arith.mulf %64, %75 : vector<128x1xf32>
        %78 = arith.subf %6, %77 : vector<128x1xf32>
        %c0_34 = arith.constant 0 : index
        %c7 = arith.constant 7 : index
        %79 = vector.load %arg7[%c0_34, %c7] : memref<128x8xf32, #tpu.memory_space<vmem>>, vector<128x1xf32>
        tpu.vector_store %arg7[%c0_34, %c7], %78 {strides = array<i32>} : memref<128x8xf32, #tpu.memory_space<vmem>>, vector<128x1xf32>,
      } else {
      }
    } else {
    }
    %c2_i32 = arith.constant 2 : i32
    %30 = arith.cmpi eq, %arg0, %c2_i32 : i32
    %31 = arith.extui %30 : i1 to i32
    %c0_i32_8 = arith.constant 0 : i32
    %32 = arith.cmpi ne, %31, %c0_i32_8 : i32
    scf.if %32 {
      %c0_9 = arith.constant 0 : index
      %c2 = arith.constant 2 : index
      %33 = vector.load %arg7[%c0_9, %c2] : memref<128x8xf32, #tpu.memory_space<vmem>>, vector<128x1xf32>
      %c0_10 = arith.constant 0 : index
      %c3 = arith.constant 3 : index
      %34 = vector.load %arg7[%c0_10, %c3] : memref<128x8xf32, #tpu.memory_space<vmem>>, vector<128x1xf32>
      %35 = vector.broadcast %33 : vector<128x1xf32> to vector<128x128xf32>
      %36 = arith.mulf %23, %35 : vector<128x128xf32>
      %37 = vector.broadcast %34 : vector<128x1xf32> to vector<128x128xf32>
      %38 = arith.addf %36, %37 : vector<128x128xf32>
      %39 = arith.truncf %38 : vector<128x128xf32> to vector<128x128xbf16>
      %c0_11 = arith.constant 0 : index
      %c0_12 = arith.constant 0 : index
      %40 = vector.load %arg4[%c0_11, %c0_12] : memref<128x128xbf16, #tpu.memory_space<vmem>>, vector<128x128xbf16>
      %cst_13 = arith.constant dense<0.000000e+00> : vector<128x128xf32>
      %41 = tpu.matmul %40, %39, %cst_13 {dimension_numbers = #tpu.dot_dimension_numbers<[1], [0], [0], [1], [0, 0, 1, 1], [], []>} : vector<128x128xbf16>, vector<128x128xbf16>, vector<128x128xf32> -> vector<128x128xf32>
      %42 = vector.broadcast %4 : vector<128x1xf32> to vector<128x128xf32>
      %43 = arith.addf %41, %42 : vector<128x128xf32>
      %cst_14 = arith.constant 0.000000e+00 : f32
      %44 = vector.broadcast %cst_14 : f32 to vector<128x128xf32>
      %45 = arith.maximumf %43, %44 : vector<128x128xf32>
      %c0_15 = arith.constant 0 : index
      %c6 = arith.constant 6 : index
      %46 = vector.load %arg7[%c0_15, %c6] : memref<128x8xf32, #tpu.memory_space<vmem>>, vector<128x1xf32>
      %47 = vector.broadcast %46 : vector<128x1xf32> to vector<128x128xf32>
      %48 = arith.mulf %45, %47 : vector<128x128xf32>
      %c0_16 = arith.constant 0 : index
      %c7 = arith.constant 7 : index
      %49 = vector.load %arg7[%c0_16, %c7] : memref<128x8xf32, #tpu.memory_space<vmem>>, vector<128x1xf32>
      %50 = vector.broadcast %49 : vector<128x1xf32> to vector<128x128xf32>
      %51 = arith.addf %48, %50 : vector<128x128xf32>
      %52 = vector.broadcast %7 : vector<128x1xf32> to vector<128x128xf32>
      %53 = arith.mulf %51, %52 : vector<128x128xf32>
      %cst_17 = arith.constant dense<0.000000e+00> : vector<128xf32>
      %54 = vector.multi_reduction <add>, %53, %cst_17 [0] : vector<128x128xf32> to vector<128xf32>
      %55 = vector.shape_cast %54 : vector<128xf32> to vector<1x128xf32>
      %56 = vector.broadcast %8 : vector<1x1xf32> to vector<1x128xf32>
      %57 = arith.addf %55, %56 : vector<1x128xf32>
      %c0_18 = arith.constant 0 : index
      %c0_19 = arith.constant 0 : index
      %58 = vector.load %arg6[%c0_18, %c0_19] : memref<1x128xf32, #tpu.memory_space<vmem>>, vector<1x128xf32>
      tpu.vector_store %arg6[%c0_18, %c0_19], %57 {strides = array<i32>} : memref<1x128xf32, #tpu.memory_space<vmem>>, vector<1x128xf32>,
    } else {
    }
    return
  }
  func.func @transform_0(%arg0: i32, %arg1: i32) -> (i32, i32) {
    %c0_i32 = arith.constant 0 : i32
    %c0_i32_0 = arith.constant 0 : i32
    return %c0_i32, %arg1 : i32, i32
  }
  func.func @transform_1(%arg0: i32, %arg1: i32) -> (i32, i32) {
    %c0_i32 = arith.constant 0 : i32
    %c0_i32_0 = arith.constant 0 : i32
    %c0_i32_1 = arith.constant 0 : i32
    return %c0_i32, %c0_i32_0 : i32, i32
  }
  func.func @transform_2(%arg0: i32, %arg1: i32) -> (i32, i32) {
    %c0_i32 = arith.constant 0 : i32
    %c0_i32_0 = arith.constant 0 : i32
    %c0_i32_1 = arith.constant 0 : i32
    return %c0_i32, %c0_i32_0 : i32, i32
  }
  func.func @transform_3(%arg0: i32, %arg1: i32) -> (i32, i32) {
    %c0_i32 = arith.constant 0 : i32
    %c0_i32_0 = arith.constant 0 : i32
    %c0_i32_1 = arith.constant 0 : i32
    return %c0_i32, %c0_i32_0 : i32, i32
  }
  func.func @transform_4(%arg0: i32, %arg1: i32) -> (i32, i32) {
    %c0_i32 = arith.constant 0 : i32
    %c0_i32_0 = arith.constant 0 : i32
    return %c0_i32, %arg1 : i32, i32
  }
}

</mosaic_0001>

<llo_original>
// kernel: tpu_custom_call.1
$region0: #{tpu_custom_call.1}
  #allocation0 [shape = 'u32[]', space=smem, size = 0x4, offset = 0x4, fixed_abs, tag = 'smem constant byte address 0x4 - core index']
  #allocation1 [shape = 'u32[72,128]{1,0:T(1,128)}', space=vmem, size = 0x9000, scoped, tag = 'internal scratch']
  #allocation2 [shape = 'f32[128,8]{1,0:T(8,128)}', space=vmem, size = 0x10000, scoped, tag = 'scratch operand']
  %s0 = inlined_call_operand.vmem [shape: bf16[8,128], index: 0, kind: input, shape index: {}]
  %s1 = inlined_call_operand.vmem [shape: bf16[128,8], index: 1, kind: input, shape index: {}]
  %s2 = inlined_call_operand.vmem [shape: bf16[128,128], index: 2, kind: input, shape index: {}]
  %s3 = inlined_call_operand.vmem [shape: f32[128,8], index: 3, kind: input, shape index: {}]
  %s4 = inlined_call_operand.hbm [shape: f32[1,128], index: 4, kind: output, shape index: {}]
  %s5 = sld [smem:[#allocation0]]
  $region73: #{tpu_custom_call.1} parent=0
    _
  %s7 = ssub.s32 1, %s5
  %s8 = scalar_select 0, %s7, %s5
  $region1: #{tpu_custom_call.1} parent=0
    #allocation3 [shape = 'u8[512]{0}', space=vmem, size = 0x400, scoped, tag = 'output window, operand 0, single buffered']
    #allocation4 [shape = 's32[2]{0}', space=sflag, size = 0x8, scoped, tag = 'scoped memory for tpu_custom_call.1']
    %9 = vsyncpa [#allocation4], 0
    loop: start=0, step=1, limit=5
    $region2: #{tpu_custom_call.1} parent=1 // loop_pre_header
      _
    $region3: #{tpu_custom_call.1} parent=1 // loop_header
      %s11 = sphi 0, %s15
      %p12 = scmp.ge.s32.totalorder %s11, 5
      %s18 = sphi 0, %s30
      %s19 = sphi 0, %s26
      %s20 = sphi 0, %s18
      %s21 = sphi 0, %s19
      %s22 = sphi 0, %s20
      %s23 = sphi 0, %s21
      %s33 = sphi 0, %s35
      %s36 = sphi 0, %s33
      %s37 = sphi 0, %s36
      %s53 = sphi 0, %s37
      %s57 = sphi 0, %s57
      %s59 = sphi 0, %s57
      %s60 = sphi 0, %s59
      %s74 = sphi 0, %s60
      %s78 = sphi 0, %s78
      %s80 = sphi 0, %s78
      %s81 = sphi 0, %s80
      %s95 = sphi 0, %s81
      %s99 = sphi 0, %s99
      %s101 = sphi 0, %s99
      %s102 = sphi 0, %s101
      %s116 = sphi 0, %s102
      %s122 = sphi 0, %s124
      %s125 = sphi 0, %s122
      %s126 = sphi 0, %s125
      %s142 = sphi 0, %s126
    $region4: #{tpu_custom_call.1} parent=1 // loop_header_branch
      %14 = sbr.rel (%p12) target = $region8
    $region5: #{tpu_custom_call.1} parent=1 // loop_body
      %s16 = ssub.s32 %s11, 1
      %s17 = ssub.s32 %s11, 2
      %s24 = sadd.s32 1, %s19
      %p25 = scmp.ge.s32.totalorder %s24, 1
      %s26 = scalar_select %p25, 0, %s24
      %s27 = sadd.s32 1, %s18
      %s28 = scalar_select %p25, %s27, %s18
      %p29 = scmp.ge.s32.totalorder %s28, 3
      %s30 = scalar_select %p29, 0, %s28
      %s31 = ssub.s32 %s19, %s26
      %p32 = scmp.eq.s32.totalorder %s31, 0
      %s34 = sadd.s32 %s33, 1
      %s35 = scalar_select %p32, %s33, %s34
      %p38 = pneg %p32
      %p39 = scmp.eq.s32.totalorder %s11, 2
      %p40 = por %p38, %p39
      %p41 = scmp.ne.s32.totalorder %s33, %s36
      %p42 = scmp.eq.s32.totalorder %s11, 0
      %p43 = por %p41, %p42
      %p44 = scmp.ne.s32.totalorder %s33, %s36
      %p45 = scmp.eq.s32.totalorder %s16, 2
      %p46 = por %p44, %p45
      %p47 = scmp.ne.s32.totalorder %s36, %s37
      %p48 = scmp.eq.s32.totalorder %s16, 0
      %p49 = por %p47, %p48
      %p50 = scmp.ne.s32.totalorder %s36, %s37
      %p51 = scmp.eq.s32.totalorder %s17, 2
      %p52 = por %p50, %p51
      %p54 = scmp.ne.s32.totalorder %s37, %s53
      %p55 = scmp.eq.s32.totalorder %s17, 0
      %p56 = por %p54, %p55
      %s58 = sadd.s32 %s57, 1
      %p61 = scmp.eq.s32.totalorder %s11, 2
      %p62 = scmp.ne.s32.totalorder %s57, %s59
      %p63 = scmp.eq.s32.totalorder %s11, 0
      %p64 = por %p62, %p63
      %p65 = scmp.ne.s32.totalorder %s57, %s59
      %p66 = scmp.eq.s32.totalorder %s16, 2
      %p67 = por %p65, %p66
      %p68 = scmp.ne.s32.totalorder %s59, %s60
      %p69 = scmp.eq.s32.totalorder %s16, 0
      %p70 = por %p68, %p69
      %p71 = scmp.ne.s32.totalorder %s59, %s60
      %p72 = scmp.eq.s32.totalorder %s17, 2
      %p73 = por %p71, %p72
      %p75 = scmp.ne.s32.totalorder %s60, %s74
      %p76 = scmp.eq.s32.totalorder %s17, 0
      %p77 = por %p75, %p76
      %s79 = sadd.s32 %s78, 1
      %p82 = scmp.eq.s32.totalorder %s11, 2
      %p83 = scmp.ne.s32.totalorder %s78, %s80
      %p84 = scmp.eq.s32.totalorder %s11, 0
      %p85 = por %p83, %p84
      %p86 = scmp.ne.s32.totalorder %s78, %s80
      %p87 = scmp.eq.s32.totalorder %s16, 2
      %p88 = por %p86, %p87
      %p89 = scmp.ne.s32.totalorder %s80, %s81
      %p90 = scmp.eq.s32.totalorder %s16, 0
      %p91 = por %p89, %p90
      %p92 = scmp.ne.s32.totalorder %s80, %s81
      %p93 = scmp.eq.s32.totalorder %s17, 2
      %p94 = por %p92, %p93
      %p96 = scmp.ne.s32.totalorder %s81, %s95
      %p97 = scmp.eq.s32.totalorder %s17, 0
      %p98 = por %p96, %p97
      %s100 = sadd.s32 %s99, 1
      %p103 = scmp.eq.s32.totalorder %s11, 2
      %p104 = scmp.ne.s32.totalorder %s99, %s101
      %p105 = scmp.eq.s32.totalorder %s11, 0
      %p106 = por %p104, %p105
      %p107 = scmp.ne.s32.totalorder %s99, %s101
      %p108 = scmp.eq.s32.totalorder %s16, 2
      %p109 = por %p107, %p108
      %p110 = scmp.ne.s32.totalorder %s101, %s102
      %p111 = scmp.eq.s32.totalorder %s16, 0
      %p112 = por %p110, %p111
      %p113 = scmp.ne.s32.totalorder %s101, %s102
      %p114 = scmp.eq.s32.totalorder %s17, 2
      %p115 = por %p113, %p114
      %p117 = scmp.ne.s32.totalorder %s102, %s116
      %p118 = scmp.eq.s32.totalorder %s17, 0
      %p119 = por %p117, %p118
      %s120 = ssub.s32 %s19, %s26
      %p121 = scmp.eq.s32.totalorder %s120, 0
      %s123 = sadd.s32 %s122, 1
      %s124 = scalar_select %p121, %s122, %s123
      %p127 = pneg %p121
      %p128 = scmp.eq.s32.totalorder %s11, 2
      %p129 = por %p127, %p128
      %p130 = scmp.ne.s32.totalorder %s122, %s125
      %p131 = scmp.eq.s32.totalorder %s11, 0
      %p132 = por %p130, %p131
      %p133 = scmp.ne.s32.totalorder %s122, %s125
      %p134 = scmp.eq.s32.totalorder %s16, 2
      %p135 = por %p133, %p134
      %p136 = scmp.ne.s32.totalorder %s125, %s126
      %p137 = scmp.eq.s32.totalorder %s16, 0
      %p138 = por %p136, %p137
      %p139 = scmp.ne.s32.totalorder %s125, %s126
      %p140 = scmp.eq.s32.totalorder %s17, 2
      %p141 = por %p139, %p140
      %p143 = scmp.ne.s32.totalorder %s126, %s142
      %p144 = scmp.eq.s32.totalorder %s17, 0
      %p145 = por %p143, %p144
      %p146 = scmp.le.s32.totalorder 1, %s11
      %p147 = scmp.lt.s32.totalorder %s11, 4
      %p148 = pnand %p146, %p147
      %p149 = pneg %p148
      // Predicated region
      $region9: #{tpu_custom_call.1} parent=5 // pred_check
        _
      $region10: #{tpu_custom_call.1} parent=5 // pred_check_branch
        %151 = sbr.rel (%p148) target = $region12
      $region11: #{tpu_custom_call.1} parent=5 // pred_region
        %s152 = ssub.s32 %s11, 1
        // Predicated region
        $region13: #{tpu_custom_call.1} parent=11 // pred_check
          %p153 = pneg %p49
        $region14: #{tpu_custom_call.1} parent=11 // pred_check_branch
          %155 = sbr.rel (%p153) target = $region16
        $region15: #{tpu_custom_call.1} parent=11 // pred_region
          %p156 = scmp.lt.s32.totalorder %s21, 0
          %s157 = scalar_select %p156, %s21, 0
          %s158 = smul.addr %s157, 4
          %s159 = scalar_lea.vmem %s0, %s158
        $region16: #{tpu_custom_call.1} parent=11 // pred_fallthru
          _
        // Predicated region
        $region17: #{tpu_custom_call.1} parent=11 // pred_check
          %p160 = pneg %p70
        $region18: #{tpu_custom_call.1} parent=11 // pred_check_branch
          %162 = sbr.rel (%p160) target = $region20
        $region19: #{tpu_custom_call.1} parent=11 // pred_region
          _
        $region20: #{tpu_custom_call.1} parent=11 // pred_fallthru
          _
        // Predicated region
        $region21: #{tpu_custom_call.1} parent=11 // pred_check
          %p163 = pneg %p91
        $region22: #{tpu_custom_call.1} parent=11 // pred_check_branch
          %165 = sbr.rel (%p163) target = $region24
        $region23: #{tpu_custom_call.1} parent=11 // pred_region
          _
        $region24: #{tpu_custom_call.1} parent=11 // pred_fallthru
          _
        // Predicated region
        $region25: #{tpu_custom_call.1} parent=11 // pred_check
          %p166 = pneg %p112
        $region26: #{tpu_custom_call.1} parent=11 // pred_check_branch
          %168 = sbr.rel (%p166) target = $region28
        $region27: #{tpu_custom_call.1} parent=11 // pred_region
          _
        $region28: #{tpu_custom_call.1} parent=11 // pred_fallthru
          _
      $region12: #{tpu_custom_call.1} parent=5 // pred_fallthru
        _
      %p169 = scmp.lt.s32.totalorder %s11, 3
      // Predicated region
      $region29: #{tpu_custom_call.1} parent=5 // pred_check
        %p170 = pneg %p169
      $region30: #{tpu_custom_call.1} parent=5 // pred_check_branch
        %172 = sbr.rel (%p170) target = $region32
      $region31: #{tpu_custom_call.1} parent=5 // pred_region
        _
      $region32: #{tpu_custom_call.1} parent=5 // pred_fallthru
        _
      %p173 = scmp.le.s32.totalorder 1, %s11
      %p174 = scmp.lt.s32.totalorder %s11, 4
      %p175 = pnand %p173, %p174
      %p176 = pneg %p175
      // Predicated region
      $region33: #{tpu_custom_call.1} parent=5 // pred_check
        _
      $region34: #{tpu_custom_call.1} parent=5 // pred_check_branch
        %178 = sbr.rel (%p175) target = $region36
      $region35: #{tpu_custom_call.1} parent=5 // pred_region
        %s179 = ssub.s32 %s11, 1
        %p180 = scmp.lt.s32.totalorder %s21, 0
        %s181 = scalar_select %p180, %s21, 0
        %s182 = smul.addr %s181, 4
        %s183 = scalar_lea.vmem %s0, %s182
        %p184 = pneg %p49
        %p185 = pneg %p46
        %p186 = pneg %p70
        %p187 = pneg %p67
        %p188 = pneg %p91
        %p189 = pneg %p88
        %p190 = pneg %p112
        %p191 = pneg %p109
        %p192 = pneg %p138
        %p193 = pneg %p135
        %p194 = scmp.lt.s32.totalorder %s21, 0
        %s195 = scalar_select %p194, %s21, 0
        %s196 = smul.addr %s195, 4
        %s197 = scalar_lea.vmem %s0, %s196
        %v199 = vld [vmem:[%s3] sm:$0xff]
        %v200 = vld [vmem:[%s3 + $0x8] sm:$0xff]
        %v201 = vld [vmem:[%s3 + $0x10] sm:$0xff]
        %v202 = vld [vmem:[%s3 + $0x18] sm:$0xff]
        %v203 = vld [vmem:[%s3 + $0x20] sm:$0xff]
        %v204 = vld [vmem:[%s3 + $0x28] sm:$0xff]
        %v205 = vld [vmem:[%s3 + $0x30] sm:$0xff]
        %v206 = vld [vmem:[%s3 + $0x38] sm:$0xff]
        %v207 = vld [vmem:[%s3 + $0x40] sm:$0xff]
        %v208 = vld [vmem:[%s3 + $0x48] sm:$0xff]
        %v209 = vld [vmem:[%s3 + $0x50] sm:$0xff]
        %v210 = vld [vmem:[%s3 + $0x58] sm:$0xff]
        %v211 = vld [vmem:[%s3 + $0x60] sm:$0xff]
        %v212 = vld [vmem:[%s3 + $0x68] sm:$0xff]
        %v213 = vld [vmem:[%s3 + $0x70] sm:$0xff]
        %v214 = vld [vmem:[%s3 + $0x78] sm:$0xff]
        %v215 = vlaneseq
        %v216 = vand.u32 %v215, 127
        %s217 = smul.u32 %s21, 128
        %v218 = vstv %s217
        %v219 = vadd.s32 %v218, %v216
        %vm220 = vcmp.lt.s32.totalorder %v219, 8
        %v221 = vsel %vm220, 1, 0
        %v222 = vcvt.s32.f32 %v221
        %v223 = vld [vmem:[%s1] sm:$0xf]
        %v224 = vld [vmem:[%s1 + $0x4] sm:$0xf]
        %v225 = vld [vmem:[%s1 + $0x8] sm:$0xf]
        %v226 = vld [vmem:[%s1 + $0xc] sm:$0xf]
        %v227 = vld [vmem:[%s1 + $0x10] sm:$0xf]
        %v228 = vld [vmem:[%s1 + $0x14] sm:$0xf]
        %v229 = vld [vmem:[%s1 + $0x18] sm:$0xf]
        %v230 = vld [vmem:[%s1 + $0x1c] sm:$0xf]
        %v231 = vld [vmem:[%s1 + $0x20] sm:$0xf]
        %v232 = vld [vmem:[%s1 + $0x24] sm:$0xf]
        %v233 = vld [vmem:[%s1 + $0x28] sm:$0xf]
        %v234 = vld [vmem:[%s1 + $0x2c] sm:$0xf]
        %v235 = vld [vmem:[%s1 + $0x30] sm:$0xf]
        %v236 = vld [vmem:[%s1 + $0x34] sm:$0xf]
        %v237 = vld [vmem:[%s1 + $0x38] sm:$0xf]
        %v238 = vld [vmem:[%s1 + $0x3c] sm:$0xf]
        %v239 = vld [vmem:[%s197] sm:$0xf]
        %241 = vset.pattern.permute.xlu0 0
        %242 = vperm.xlu0 %241, %v199
        %v243 = vpop.permute.xlu0 %242
        %246 = vset.pattern.permute.xlu0 0
        %247 = vperm.xlu0 %246, %v200
        %v248 = vpop.permute.xlu0 %247
        %251 = vset.pattern.permute.xlu0 0
        %252 = vperm.xlu0 %251, %v201
        %v253 = vpop.permute.xlu0 %252
        %256 = vset.pattern.permute.xlu0 0
        %257 = vperm.xlu0 %256, %v202
        %v258 = vpop.permute.xlu0 %257
        %261 = vset.pattern.permute.xlu0 0
        %262 = vperm.xlu0 %261, %v203
        %v263 = vpop.permute.xlu0 %262
        %266 = vset.pattern.permute.xlu0 0
        %267 = vperm.xlu0 %266, %v204
        %v268 = vpop.permute.xlu0 %267
        %271 = vset.pattern.permute.xlu0 0
        %272 = vperm.xlu0 %271, %v205
        %v273 = vpop.permute.xlu0 %272
        %276 = vset.pattern.permute.xlu0 0
        %277 = vperm.xlu0 %276, %v206
        %v278 = vpop.permute.xlu0 %277
        %281 = vset.pattern.permute.xlu0 0
        %282 = vperm.xlu0 %281, %v207
        %v283 = vpop.permute.xlu0 %282
        %286 = vset.pattern.permute.xlu0 0
        %287 = vperm.xlu0 %286, %v208
        %v288 = vpop.permute.xlu0 %287
        %291 = vset.pattern.permute.xlu0 0
        %292 = vperm.xlu0 %291, %v209
        %v293 = vpop.permute.xlu0 %292
        %296 = vset.pattern.permute.xlu0 0
        %297 = vperm.xlu0 %296, %v210
        %v298 = vpop.permute.xlu0 %297
        %301 = vset.pattern.permute.xlu0 0
        %302 = vperm.xlu0 %301, %v211
        %v303 = vpop.permute.xlu0 %302
        %306 = vset.pattern.permute.xlu0 0
        %307 = vperm.xlu0 %306, %v212
        %v308 = vpop.permute.xlu0 %307
        %311 = vset.pattern.permute.xlu0 0
        %312 = vperm.xlu0 %311, %v213
        %v313 = vpop.permute.xlu0 %312
        %316 = vset.pattern.permute.xlu0 0
        %317 = vperm.xlu0 %316, %v214
        %v318 = vpop.permute.xlu0 %317
        %v336 = vunpack.c.l.b16 %v223
        %v337 = vunpack.c.l.b16 %v224
        %v338 = vunpack.c.l.b16 %v225
        %v339 = vunpack.c.l.b16 %v226
        %v340 = vunpack.c.l.b16 %v227
        %v341 = vunpack.c.l.b16 %v228
        %v342 = vunpack.c.l.b16 %v229
        %v343 = vunpack.c.l.b16 %v230
        %v344 = vunpack.c.l.b16 %v231
        %v345 = vunpack.c.l.b16 %v232
        %v346 = vunpack.c.l.b16 %v233
        %v347 = vunpack.c.l.b16 %v234
        %v348 = vunpack.c.l.b16 %v235
        %v349 = vunpack.c.l.b16 %v236
        %v350 = vunpack.c.l.b16 %v237
        %v351 = vunpack.c.l.b16 %v238
        %v352 = vpack.c.b16 %v337, %v336
        %v353 = vpack.c.b16 %v339, %v338
        %v354 = vpack.c.b16 %v341, %v340
        %v355 = vpack.c.b16 %v343, %v342
        %v356 = vpack.c.b16 %v345, %v344
        %v357 = vpack.c.b16 %v347, %v346
        %v358 = vpack.c.b16 %v349, %v348
        %v359 = vpack.c.b16 %v351, %v350
        %vm360 = vcmask 64512
        %v362 = vsel %vm360, %v352, 0
        %v365 = vsel %vm360, %v353, 0
        %v368 = vsel %vm360, %v354, 0
        %v371 = vsel %vm360, %v355, 0
        %v374 = vsel %vm360, %v356, 0
        %v377 = vsel %vm360, %v357, 0
        %v380 = vsel %vm360, %v358, 0
        %v383 = vsel %vm360, %v359, 0
        %vm385 = vcmask 1043456
        %v387 = vsel %vm385, %v239, 0
        %389 = vmatpush.bf16.msra.mxu0 0
        %390 = vmatpush.bf16.msra.mxu0 0
        %391 = vmatpush.bf16.msra.mxu0 0
        %392 = vmatpush.bf16.msra.mxu0 0
        %393 = vmatpush.bf16.msra.mxu0 0
        %394 = vmatpush.bf16.msra.mxu0 0
        %395 = vmatpush.bf16.msra.mxu0 0
        %396 = vmatpush.bf16.msra.mxu0 %v387
        %397 = vmatmul.bf16.gmra.mxu0 %v362
        %v398 = vpop.f32.mrf.mxu0
        %v399 = vadd.f32 %v243, %v398
        %v400 = vpop.f32.mrf.mxu0
        %v401 = vadd.f32 %v248, %v400
        %402 = vmatmul.bf16.gmra.mxu0 %v365
        %v403 = vpop.f32.mrf.mxu0
        %v404 = vadd.f32 %v253, %v403
        %v405 = vpop.f32.mrf.mxu0
        %v406 = vadd.f32 %v258, %v405
        %407 = vmatmul.bf16.gmra.mxu0 %v368
        %v408 = vpop.f32.mrf.mxu0
        %v409 = vadd.f32 %v263, %v408
        %v410 = vpop.f32.mrf.mxu0
        %v411 = vadd.f32 %v268, %v410
        %412 = vmatmul.bf16.gmra.mxu0 %v371
        %v413 = vpop.f32.mrf.mxu0
        %v414 = vadd.f32 %v273, %v413
        %v415 = vpop.f32.mrf.mxu0
        %v416 = vadd.f32 %v278, %v415
        %417 = vmatmul.bf16.gmra.mxu0 %v374
        %v418 = vpop.f32.mrf.mxu0
        %v419 = vadd.f32 %v283, %v418
        %v420 = vpop.f32.mrf.mxu0
        %v421 = vadd.f32 %v288, %v420
        %422 = vmatmul.bf16.gmra.mxu0 %v377
        %v423 = vpop.f32.mrf.mxu0
        %v424 = vadd.f32 %v293, %v423
        %v425 = vpop.f32.mrf.mxu0
        %v426 = vadd.f32 %v298, %v425
        %427 = vmatmul.bf16.gmra.mxu0 %v380
        %v428 = vpop.f32.mrf.mxu0
        %v429 = vadd.f32 %v303, %v428
        %v430 = vpop.f32.mrf.mxu0
        %v431 = vadd.f32 %v308, %v430
        %432 = vmatmul.bf16.gmra.mxu0 %v383
        %v433 = vpop.f32.mrf.mxu0
        %v434 = vadd.f32 %v313, %v433
        %v435 = vpop.f32.mrf.mxu0
        %v436 = vadd.f32 %v318, %v435
        %437 = vdwg.mxu0
        %v438 = vmax.f32 %v399, 0.0
        %v439 = vmax.f32 %v401, 0.0
        %v440 = vmax.f32 %v404, 0.0
        %v441 = vmax.f32 %v406, 0.0
        %v442 = vmax.f32 %v409, 0.0
        %v443 = vmax.f32 %v411, 0.0
        %v444 = vmax.f32 %v414, 0.0
        %v445 = vmax.f32 %v416, 0.0
        %v446 = vmax.f32 %v419, 0.0
        %v447 = vmax.f32 %v421, 0.0
        %v448 = vmax.f32 %v424, 0.0
        %v449 = vmax.f32 %v426, 0.0
        %v450 = vmax.f32 %v429, 0.0
        %v451 = vmax.f32 %v431, 0.0
        %v452 = vmax.f32 %v434, 0.0
        %v453 = vmax.f32 %v436, 0.0
        %p454 = scmp.eq.s32.totalorder %s20, 0
        // Predicated region
        $region37: #{tpu_custom_call.1} parent=35 // pred_check
          %p455 = pneg %p454
        $region38: #{tpu_custom_call.1} parent=35 // pred_check_branch
          %457 = sbr.rel (%p455) target = $region40
        $region39: #{tpu_custom_call.1} parent=35 // pred_region
          %p458 = scmp.eq.s32.totalorder %s21, 0
          // Predicated region
          $region41: #{tpu_custom_call.1} parent=39 // pred_check
            %p459 = pneg %p458
          $region42: #{tpu_custom_call.1} parent=39 // pred_check_branch
            %461 = sbr.rel (%p459) target = $region44
          $region43: #{tpu_custom_call.1} parent=39 // pred_region
            %462 = vst.msk [vmem:[#allocation2] sm:$0xff] %vm360, 0.0
            %463 = vst.msk [vmem:[#allocation2 + $0x8] sm:$0xff] %vm360, 0.0
            %464 = vst.msk [vmem:[#allocation2 + $0x10] sm:$0xff] %vm360, 0.0
            %465 = vst.msk [vmem:[#allocation2 + $0x18] sm:$0xff] %vm360, 0.0
            %466 = vst.msk [vmem:[#allocation2 + $0x20] sm:$0xff] %vm360, 0.0
            %467 = vst.msk [vmem:[#allocation2 + $0x28] sm:$0xff] %vm360, 0.0
            %468 = vst.msk [vmem:[#allocation2 + $0x30] sm:$0xff] %vm360, 0.0
            %469 = vst.msk [vmem:[#allocation2 + $0x38] sm:$0xff] %vm360, 0.0
            %470 = vst.msk [vmem:[#allocation2 + $0x40] sm:$0xff] %vm360, 0.0
            %471 = vst.msk [vmem:[#allocation2 + $0x48] sm:$0xff] %vm360, 0.0
            %472 = vst.msk [vmem:[#allocation2 + $0x50] sm:$0xff] %vm360, 0.0
            %473 = vst.msk [vmem:[#allocation2 + $0x58] sm:$0xff] %vm360, 0.0
            %474 = vst.msk [vmem:[#allocation2 + $0x60] sm:$0xff] %vm360, 0.0
            %475 = vst.msk [vmem:[#allocation2 + $0x68] sm:$0xff] %vm360, 0.0
            %476 = vst.msk [vmem:[#allocation2 + $0x70] sm:$0xff] %vm360, 0.0
            %477 = vst.msk [vmem:[#allocation2 + $0x78] sm:$0xff] %vm360, 0.0
          $region44: #{tpu_custom_call.1} parent=39 // pred_fallthru
            _
          %v478 = vmul.f32 %v438, %v222
          %v479 = vmul.f32 %v439, %v222
          %v480 = vmul.f32 %v440, %v222
          %v481 = vmul.f32 %v441, %v222
          %v482 = vmul.f32 %v442, %v222
          %v483 = vmul.f32 %v443, %v222
          %v484 = vmul.f32 %v444, %v222
          %v485 = vmul.f32 %v445, %v222
          %v486 = vmul.f32 %v446, %v222
          %v487 = vmul.f32 %v447, %v222
          %v488 = vmul.f32 %v448, %v222
          %v489 = vmul.f32 %v449, %v222
          %v490 = vmul.f32 %v450, %v222
          %v491 = vmul.f32 %v451, %v222
          %v492 = vmul.f32 %v452, %v222
          %v493 = vmul.f32 %v453, %v222
          %v494 = vld [vmem:[#allocation2] sm:$0xff]
          %v495 = vld [vmem:[#allocation2 + $0x8] sm:$0xff]
          %v496 = vld [vmem:[#allocation2 + $0x10] sm:$0xff]
          %v497 = vld [vmem:[#allocation2 + $0x18] sm:$0xff]
          %v498 = vld [vmem:[#allocation2 + $0x20] sm:$0xff]
          %v499 = vld [vmem:[#allocation2 + $0x28] sm:$0xff]
          %v500 = vld [vmem:[#allocation2 + $0x30] sm:$0xff]
          %v501 = vld [vmem:[#allocation2 + $0x38] sm:$0xff]
          %v502 = vld [vmem:[#allocation2 + $0x40] sm:$0xff]
          %v503 = vld [vmem:[#allocation2 + $0x48] sm:$0xff]
          %v504 = vld [vmem:[#allocation2 + $0x50] sm:$0xff]
          %v505 = vld [vmem:[#allocation2 + $0x58] sm:$0xff]
          %v506 = vld [vmem:[#allocation2 + $0x60] sm:$0xff]
          %v507 = vld [vmem:[#allocation2 + $0x68] sm:$0xff]
          %v508 = vld [vmem:[#allocation2 + $0x70] sm:$0xff]
          %v509 = vld [vmem:[#allocation2 + $0x78] sm:$0xff]
          %510 = vadd.xlane.f32.xlu0 %v478
          %v511 = vpop.xlane.xlu0 %510
          %512 = vadd.xlane.f32.xlu0 %v479
          %v513 = vpop.xlane.xlu0 %512
          %514 = vadd.xlane.f32.xlu0 %v480
          %v515 = vpop.xlane.xlu0 %514
          %516 = vadd.xlane.f32.xlu0 %v481
          %v517 = vpop.xlane.xlu0 %516
          %518 = vadd.xlane.f32.xlu0 %v482
          %v519 = vpop.xlane.xlu0 %518
          %520 = vadd.xlane.f32.xlu0 %v483
          %v521 = vpop.xlane.xlu0 %520
          %522 = vadd.xlane.f32.xlu0 %v484
          %v523 = vpop.xlane.xlu0 %522
          %524 = vadd.xlane.f32.xlu0 %v485
          %v525 = vpop.xlane.xlu0 %524
          %526 = vadd.xlane.f32.xlu0 %v486
          %v527 = vpop.xlane.xlu0 %526
          %528 = vadd.xlane.f32.xlu0 %v487
          %v529 = vpop.xlane.xlu0 %528
          %530 = vadd.xlane.f32.xlu0 %v488
          %v531 = vpop.xlane.xlu0 %530
          %532 = vadd.xlane.f32.xlu0 %v489
          %v533 = vpop.xlane.xlu0 %532
          %534 = vadd.xlane.f32.xlu0 %v490
          %v535 = vpop.xlane.xlu0 %534
          %536 = vadd.xlane.f32.xlu0 %v491
          %v537 = vpop.xlane.xlu0 %536
          %538 = vadd.xlane.f32.xlu0 %v492
          %v539 = vpop.xlane.xlu0 %538
          %540 = vadd.xlane.f32.xlu0 %v493
          %v541 = vpop.xlane.xlu0 %540
          %v542 = vadd.f32 %v494, %v511
          %v543 = vadd.f32 %v495, %v513
          %v544 = vadd.f32 %v496, %v515
          %v545 = vadd.f32 %v497, %v517
          %v546 = vadd.f32 %v498, %v519
          %v547 = vadd.f32 %v499, %v521
          %v548 = vadd.f32 %v500, %v523
          %v549 = vadd.f32 %v501, %v525
          %v550 = vadd.f32 %v502, %v527
          %v551 = vadd.f32 %v503, %v529
          %v552 = vadd.f32 %v504, %v531
          %v553 = vadd.f32 %v505, %v533
          %v554 = vadd.f32 %v506, %v535
          %v555 = vadd.f32 %v507, %v537
          %v556 = vadd.f32 %v508, %v539
          %v557 = vadd.f32 %v509, %v541
          %vm558 = vcmask 7168
          %559 = vst.msk [vmem:[#allocation2] sm:$0xff] %vm558, %v542
          %560 = vst.msk [vmem:[#allocation2 + $0x8] sm:$0xff] %vm558, %v543
          %561 = vst.msk [vmem:[#allocation2 + $0x10] sm:$0xff] %vm558, %v544
          %562 = vst.msk [vmem:[#allocation2 + $0x18] sm:$0xff] %vm558, %v545
          %563 = vst.msk [vmem:[#allocation2 + $0x20] sm:$0xff] %vm558, %v546
          %564 = vst.msk [vmem:[#allocation2 + $0x28] sm:$0xff] %vm558, %v547
          %565 = vst.msk [vmem:[#allocation2 + $0x30] sm:$0xff] %vm558, %v548
          %566 = vst.msk [vmem:[#allocation2 + $0x38] sm:$0xff] %vm558, %v549
          %567 = vst.msk [vmem:[#allocation2 + $0x40] sm:$0xff] %vm558, %v550
          %568 = vst.msk [vmem:[#allocation2 + $0x48] sm:$0xff] %vm558, %v551
          %569 = vst.msk [vmem:[#allocation2 + $0x50] sm:$0xff] %vm558, %v552
          %570 = vst.msk [vmem:[#allocation2 + $0x58] sm:$0xff] %vm558, %v553
          %571 = vst.msk [vmem:[#allocation2 + $0x60] sm:$0xff] %vm558, %v554
          %572 = vst.msk [vmem:[#allocation2 + $0x68] sm:$0xff] %vm558, %v555
          %573 = vst.msk [vmem:[#allocation2 + $0x70] sm:$0xff] %vm558, %v556
          %574 = vst.msk [vmem:[#allocation2 + $0x78] sm:$0xff] %vm558, %v557
          %v575 = vld [vmem:[#allocation2] sm:$0xff]
          %v576 = vld [vmem:[#allocation2 + $0x8] sm:$0xff]
          %v577 = vld [vmem:[#allocation2 + $0x10] sm:$0xff]
          %v578 = vld [vmem:[#allocation2 + $0x18] sm:$0xff]
          %v579 = vld [vmem:[#allocation2 + $0x20] sm:$0xff]
          %v580 = vld [vmem:[#allocation2 + $0x28] sm:$0xff]
          %v581 = vld [vmem:[#allocation2 + $0x30] sm:$0xff]
          %v582 = vld [vmem:[#allocation2 + $0x38] sm:$0xff]
          %v583 = vld [vmem:[#allocation2 + $0x40] sm:$0xff]
          %v584 = vld [vmem:[#allocation2 + $0x48] sm:$0xff]
          %v585 = vld [vmem:[#allocation2 + $0x50] sm:$0xff]
          %v586 = vld [vmem:[#allocation2 + $0x58] sm:$0xff]
          %v587 = vld [vmem:[#allocation2 + $0x60] sm:$0xff]
          %v588 = vld [vmem:[#allocation2 + $0x68] sm:$0xff]
          %v589 = vld [vmem:[#allocation2 + $0x70] sm:$0xff]
          %v590 = vld [vmem:[#allocation2 + $0x78] sm:$0xff]
          %v591 = vmul.f32 %v478, %v478
          %v592 = vmul.f32 %v479, %v479
          %v593 = vmul.f32 %v480, %v480
          %v594 = vmul.f32 %v481, %v481
          %v595 = vmul.f32 %v482, %v482
          %v596 = vmul.f32 %v483, %v483
          %v597 = vmul.f32 %v484, %v484
          %v598 = vmul.f32 %v485, %v485
          %v599 = vmul.f32 %v486, %v486
          %v600 = vmul.f32 %v487, %v487
          %v601 = vmul.f32 %v488, %v488
          %v602 = vmul.f32 %v489, %v489
          %v603 = vmul.f32 %v490, %v490
          %v604 = vmul.f32 %v491, %v491
          %v605 = vmul.f32 %v492, %v492
          %v606 = vmul.f32 %v493, %v493
          %607 = vadd.xlane.f32.xlu0 %v591
          %v608 = vpop.xlane.xlu0 %607
          %609 = vadd.xlane.f32.xlu0 %v592
          %v610 = vpop.xlane.xlu0 %609
          %611 = vadd.xlane.f32.xlu0 %v593
          %v612 = vpop.xlane.xlu0 %611
          %613 = vadd.xlane.f32.xlu0 %v594
          %v614 = vpop.xlane.xlu0 %613
          %615 = vadd.xlane.f32.xlu0 %v595
          %v616 = vpop.xlane.xlu0 %615
          %617 = vadd.xlane.f32.xlu0 %v596
          %v618 = vpop.xlane.xlu0 %617
          %619 = vadd.xlane.f32.xlu0 %v597
          %v620 = vpop.xlane.xlu0 %619
          %621 = vadd.xlane.f32.xlu0 %v598
          %v622 = vpop.xlane.xlu0 %621
          %623 = vadd.xlane.f32.xlu0 %v599
          %v624 = vpop.xlane.xlu0 %623
          %625 = vadd.xlane.f32.xlu0 %v600
          %v626 = vpop.xlane.xlu0 %625
          %627 = vadd.xlane.f32.xlu0 %v601
          %v628 = vpop.xlane.xlu0 %627
          %629 = vadd.xlane.f32.xlu0 %v602
          %v630 = vpop.xlane.xlu0 %629
          %631 = vadd.xlane.f32.xlu0 %v603
          %v632 = vpop.xlane.xlu0 %631
          %633 = vadd.xlane.f32.xlu0 %v604
          %v634 = vpop.xlane.xlu0 %633
          %635 = vadd.xlane.f32.xlu0 %v605
          %v636 = vpop.xlane.xlu0 %635
          %637 = vadd.xlane.f32.xlu0 %v606
          %v638 = vpop.xlane.xlu0 %637
          %v639 = vadd.f32 %v575, %v608
          %v640 = vadd.f32 %v576, %v610
          %v641 = vadd.f32 %v577, %v612
          %v642 = vadd.f32 %v578, %v614
          %v643 = vadd.f32 %v579, %v616
          %v644 = vadd.f32 %v580, %v618
          %v645 = vadd.f32 %v581, %v620
          %v646 = vadd.f32 %v582, %v622
          %v647 = vadd.f32 %v583, %v624
          %v648 = vadd.f32 %v584, %v626
          %v649 = vadd.f32 %v585, %v628
          %v650 = vadd.f32 %v586, %v630
          %v651 = vadd.f32 %v587, %v632
          %v652 = vadd.f32 %v588, %v634
          %v653 = vadd.f32 %v589, %v636
          %v654 = vadd.f32 %v590, %v638
          %vm655 = vcmask 15368
          %656 = vst.msk [vmem:[#allocation2] sm:$0xff] %vm655, %v639
          %657 = vst.msk [vmem:[#allocation2 + $0x8] sm:$0xff] %vm655, %v640
          %658 = vst.msk [vmem:[#allocation2 + $0x10] sm:$0xff] %vm655, %v641
          %659 = vst.msk [vmem:[#allocation2 + $0x18] sm:$0xff] %vm655, %v642
          %660 = vst.msk [vmem:[#allocation2 + $0x20] sm:$0xff] %vm655, %v643
          %661 = vst.msk [vmem:[#allocation2 + $0x28] sm:$0xff] %vm655, %v644
          %662 = vst.msk [vmem:[#allocation2 + $0x30] sm:$0xff] %vm655, %v645
          %663 = vst.msk [vmem:[#allocation2 + $0x38] sm:$0xff] %vm655, %v646
          %664 = vst.msk [vmem:[#allocation2 + $0x40] sm:$0xff] %vm655, %v647
          %665 = vst.msk [vmem:[#allocation2 + $0x48] sm:$0xff] %vm655, %v648
          %666 = vst.msk [vmem:[#allocation2 + $0x50] sm:$0xff] %vm655, %v649
          %667 = vst.msk [vmem:[#allocation2 + $0x58] sm:$0xff] %vm655, %v650
          %668 = vst.msk [vmem:[#allocation2 + $0x60] sm:$0xff] %vm655, %v651
          %669 = vst.msk [vmem:[#allocation2 + $0x68] sm:$0xff] %vm655, %v652
          %670 = vst.msk [vmem:[#allocation2 + $0x70] sm:$0xff] %vm655, %v653
          %671 = vst.msk [vmem:[#allocation2 + $0x78] sm:$0xff] %vm655, %v654
          // Predicated region
          $region45: #{tpu_custom_call.1} parent=39 // pred_check
            %p672 = pneg %p458
          $region46: #{tpu_custom_call.1} parent=39 // pred_check_branch
            %674 = sbr.rel (%p672) target = $region48
          $region47: #{tpu_custom_call.1} parent=39 // pred_region
            %v675 = vld [vmem:[#allocation2] sm:$0xff]
            %v676 = vld [vmem:[#allocation2 + $0x8] sm:$0xff]
            %v677 = vld [vmem:[#allocation2 + $0x10] sm:$0xff]
            %v678 = vld [vmem:[#allocation2 + $0x18] sm:$0xff]
            %v679 = vld [vmem:[#allocation2 + $0x20] sm:$0xff]
            %v680 = vld [vmem:[#allocation2 + $0x28] sm:$0xff]
            %v681 = vld [vmem:[#allocation2 + $0x30] sm:$0xff]
            %v682 = vld [vmem:[#allocation2 + $0x38] sm:$0xff]
            %v683 = vld [vmem:[#allocation2 + $0x40] sm:$0xff]
            %v684 = vld [vmem:[#allocation2 + $0x48] sm:$0xff]
            %v685 = vld [vmem:[#allocation2 + $0x50] sm:$0xff]
            %v686 = vld [vmem:[#allocation2 + $0x58] sm:$0xff]
            %v687 = vld [vmem:[#allocation2 + $0x60] sm:$0xff]
            %v688 = vld [vmem:[#allocation2 + $0x68] sm:$0xff]
            %v689 = vld [vmem:[#allocation2 + $0x70] sm:$0xff]
            %v690 = vld [vmem:[#allocation2 + $0x78] sm:$0xff]
            %v691 = vmul.f32 %v675, 0.125
            %v692 = vmul.f32 %v676, 0.125
            %v693 = vmul.f32 %v677, 0.125
            %v694 = vmul.f32 %v678, 0.125
            %v695 = vmul.f32 %v679, 0.125
            %v696 = vmul.f32 %v680, 0.125
            %v697 = vmul.f32 %v681, 0.125
            %v698 = vmul.f32 %v682, 0.125
            %v699 = vmul.f32 %v683, 0.125
            %v700 = vmul.f32 %v684, 0.125
            %v701 = vmul.f32 %v685, 0.125
            %v702 = vmul.f32 %v686, 0.125
            %v703 = vmul.f32 %v687, 0.125
            %v704 = vmul.f32 %v688, 0.125
            %v705 = vmul.f32 %v689, 0.125
            %v706 = vmul.f32 %v690, 0.125
            %v707 = vmul.f32 %v691, %v691
            %v708 = vmul.f32 %v692, %v692
            %v709 = vmul.f32 %v693, %v693
            %v710 = vmul.f32 %v694, %v694
            %v711 = vmul.f32 %v695, %v695
            %v712 = vmul.f32 %v696, %v696
            %v713 = vmul.f32 %v697, %v697
            %v714 = vmul.f32 %v698, %v698
            %v715 = vmul.f32 %v699, %v699
            %v716 = vmul.f32 %v700, %v700
            %v717 = vmul.f32 %v701, %v701
            %v718 = vmul.f32 %v702, %v702
            %v719 = vmul.f32 %v703, %v703
            %v720 = vmul.f32 %v704, %v704
            %v721 = vmul.f32 %v705, %v705
            %v722 = vmul.f32 %v706, %v706
            %739 = vrot.lane.b32.xlu0 %v707, 1
            %v740 = vpop.permute.xlu0 %739
            %741 = vrot.lane.b32.xlu0 %v708, 1
            %v742 = vpop.permute.xlu0 %741
            %743 = vrot.lane.b32.xlu0 %v709, 1
            %v744 = vpop.permute.xlu0 %743
            %745 = vrot.lane.b32.xlu0 %v710, 1
            %v746 = vpop.permute.xlu0 %745
            %747 = vrot.lane.b32.xlu0 %v711, 1
            %v748 = vpop.permute.xlu0 %747
            %749 = vrot.lane.b32.xlu0 %v712, 1
            %v750 = vpop.permute.xlu0 %749
            %751 = vrot.lane.b32.xlu0 %v713, 1
            %v752 = vpop.permute.xlu0 %751
            %753 = vrot.lane.b32.xlu0 %v714, 1
            %v754 = vpop.permute.xlu0 %753
            %755 = vrot.lane.b32.xlu0 %v715, 1
            %v756 = vpop.permute.xlu0 %755
            %757 = vrot.lane.b32.xlu0 %v716, 1
            %v758 = vpop.permute.xlu0 %757
            %759 = vrot.lane.b32.xlu0 %v717, 1
            %v760 = vpop.permute.xlu0 %759
            %761 = vrot.lane.b32.xlu0 %v718, 1
            %v762 = vpop.permute.xlu0 %761
            %763 = vrot.lane.b32.xlu0 %v719, 1
            %v764 = vpop.permute.xlu0 %763
            %765 = vrot.lane.b32.xlu0 %v720, 1
            %v766 = vpop.permute.xlu0 %765
            %767 = vrot.lane.b32.xlu0 %v721, 1
            %v768 = vpop.permute.xlu0 %767
            %769 = vrot.lane.b32.xlu0 %v722, 1
            %v770 = vpop.permute.xlu0 %769
            %v787 = vsub.f32 %v691, %v740
            %v788 = vsub.f32 %v692, %v742
            %v789 = vsub.f32 %v693, %v744
            %v790 = vsub.f32 %v694, %v746
            %v791 = vsub.f32 %v695, %v748
            %v792 = vsub.f32 %v696, %v750
            %v793 = vsub.f32 %v697, %v752
            %v794 = vsub.f32 %v698, %v754
            %v795 = vsub.f32 %v699, %v756
            %v796 = vsub.f32 %v700, %v758
            %v797 = vsub.f32 %v701, %v760
            %v798 = vsub.f32 %v702, %v762
            %v799 = vsub.f32 %v703, %v764
            %v800 = vsub.f32 %v704, %v766
            %v801 = vsub.f32 %v705, %v768
            %v802 = vsub.f32 %v706, %v770
            %v803 = vmax.f32 %v787, 0.0
            %v804 = vmax.f32 %v788, 0.0
            %v805 = vmax.f32 %v789, 0.0
            %v806 = vmax.f32 %v790, 0.0
            %v807 = vmax.f32 %v791, 0.0
            %v808 = vmax.f32 %v792, 0.0
            %v809 = vmax.f32 %v793, 0.0
            %v810 = vmax.f32 %v794, 0.0
            %v811 = vmax.f32 %v795, 0.0
            %v812 = vmax.f32 %v796, 0.0
            %v813 = vmax.f32 %v797, 0.0
            %v814 = vmax.f32 %v798, 0.0
            %v815 = vmax.f32 %v799, 0.0
            %v816 = vmax.f32 %v800, 0.0
            %v817 = vmax.f32 %v801, 0.0
            %v818 = vmax.f32 %v802, 0.0
            %v819 = vadd.f32 %v803, 1e-05
            %v820 = vadd.f32 %v804, 1e-05
            %v821 = vadd.f32 %v805, 1e-05
            %v822 = vadd.f32 %v806, 1e-05
            %v823 = vadd.f32 %v807, 1e-05
            %v824 = vadd.f32 %v808, 1e-05
            %v825 = vadd.f32 %v809, 1e-05
            %v826 = vadd.f32 %v810, 1e-05
            %v827 = vadd.f32 %v811, 1e-05
            %v828 = vadd.f32 %v812, 1e-05
            %v829 = vadd.f32 %v813, 1e-05
            %v830 = vadd.f32 %v814, 1e-05
            %v831 = vadd.f32 %v815, 1e-05
            %v832 = vadd.f32 %v816, 1e-05
            %v833 = vadd.f32 %v817, 1e-05
            %v834 = vadd.f32 %v818, 1e-05
            %v835 = vrsqrt.pop %v819
            %v836 = vmul.f32 %v835, %v819
            %v837 = vmul.f32 %v836, %v835
            %v838 = vmul.f32 0.5, %v837
            %v839 = vsub.f32 1.5, %v838
            %v840 = vmul.f32 %v835, %v839
            %vm841 = vweird.f32 %v819
            %vm842 = vweird.f32 %v835
            %vm843 = vmor %vm841, %vm842
            %v844 = vsel %vm843, %v835, %v840
            %v845 = vrsqrt.pop %v820
            %v846 = vmul.f32 %v845, %v820
            %v847 = vmul.f32 %v846, %v845
            %v848 = vmul.f32 0.5, %v847
            %v849 = vsub.f32 1.5, %v848
            %v850 = vmul.f32 %v845, %v849
            %vm851 = vweird.f32 %v820
            %vm852 = vweird.f32 %v845
            %vm853 = vmor %vm851, %vm852
            %v854 = vsel %vm853, %v845, %v850
            %v855 = vrsqrt.pop %v821
            %v856 = vmul.f32 %v855, %v821
            %v857 = vmul.f32 %v856, %v855
            %v858 = vmul.f32 0.5, %v857
            %v859 = vsub.f32 1.5, %v858
            %v860 = vmul.f32 %v855, %v859
            %vm861 = vweird.f32 %v821
            %vm862 = vweird.f32 %v855
            %vm863 = vmor %vm861, %vm862
            %v864 = vsel %vm863, %v855, %v860
            %v865 = vrsqrt.pop %v822
            %v866 = vmul.f32 %v865, %v822
            %v867 = vmul.f32 %v866, %v865
            %v868 = vmul.f32 0.5, %v867
            %v869 = vsub.f32 1.5, %v868
            %v870 = vmul.f32 %v865, %v869
            %vm871 = vweird.f32 %v822
            %vm872 = vweird.f32 %v865
            %vm873 = vmor %vm871, %vm872
            %v874 = vsel %vm873, %v865, %v870
            %v875 = vrsqrt.pop %v823
            %v876 = vmul.f32 %v875, %v823
            %v877 = vmul.f32 %v876, %v875
            %v878 = vmul.f32 0.5, %v877
            %v879 = vsub.f32 1.5, %v878
            %v880 = vmul.f32 %v875, %v879
            %vm881 = vweird.f32 %v823
            %vm882 = vweird.f32 %v875
            %vm883 = vmor %vm881, %vm882
            %v884 = vsel %vm883, %v875, %v880
            %v885 = vrsqrt.pop %v824
            %v886 = vmul.f32 %v885, %v824
            %v887 = vmul.f32 %v886, %v885
            %v888 = vmul.f32 0.5, %v887
            %v889 = vsub.f32 1.5, %v888
            %v890 = vmul.f32 %v885, %v889
            %vm891 = vweird.f32 %v824
            %vm892 = vweird.f32 %v885
            %vm893 = vmor %vm891, %vm892
            %v894 = vsel %vm893, %v885, %v890
            %v895 = vrsqrt.pop %v825
            %v896 = vmul.f32 %v895, %v825
            %v897 = vmul.f32 %v896, %v895
            %v898 = vmul.f32 0.5, %v897
            %v899 = vsub.f32 1.5, %v898
            %v900 = vmul.f32 %v895, %v899
            %vm901 = vweird.f32 %v825
            %vm902 = vweird.f32 %v895
            %vm903 = vmor %vm901, %vm902
            %v904 = vsel %vm903, %v895, %v900
            %v905 = vrsqrt.pop %v826
            %v906 = vmul.f32 %v905, %v826
            %v907 = vmul.f32 %v906, %v905
            %v908 = vmul.f32 0.5, %v907
            %v909 = vsub.f32 1.5, %v908
            %v910 = vmul.f32 %v905, %v909
            %vm911 = vweird.f32 %v826
            %vm912 = vweird.f32 %v905
            %vm913 = vmor %vm911, %vm912
            %v914 = vsel %vm913, %v905, %v910
            %v915 = vrsqrt.pop %v827
            %v916 = vmul.f32 %v915, %v827
            %v917 = vmul.f32 %v916, %v915
            %v918 = vmul.f32 0.5, %v917
            %v919 = vsub.f32 1.5, %v918
            %v920 = vmul.f32 %v915, %v919
            %vm921 = vweird.f32 %v827
            %vm922 = vweird.f32 %v915
            %vm923 = vmor %vm921, %vm922
            %v924 = vsel %vm923, %v915, %v920
            %v925 = vrsqrt.pop %v828
            %v926 = vmul.f32 %v925, %v828
            %v927 = vmul.f32 %v926, %v925
            %v928 = vmul.f32 0.5, %v927
            %v929 = vsub.f32 1.5, %v928
            %v930 = vmul.f32 %v925, %v929
            %vm931 = vweird.f32 %v828
            %vm932 = vweird.f32 %v925
            %vm933 = vmor %vm931, %vm932
            %v934 = vsel %vm933, %v925, %v930
            %v935 = vrsqrt.pop %v829
            %v936 = vmul.f32 %v935, %v829
            %v937 = vmul.f32 %v936, %v935
            %v938 = vmul.f32 0.5, %v937
            %v939 = vsub.f32 1.5, %v938
            %v940 = vmul.f32 %v935, %v939
            %vm941 = vweird.f32 %v829
            %vm942 = vweird.f32 %v935
            %vm943 = vmor %vm941, %vm942
            %v944 = vsel %vm943, %v935, %v940
            %v945 = vrsqrt.pop %v830
            %v946 = vmul.f32 %v945, %v830
            %v947 = vmul.f32 %v946, %v945
            %v948 = vmul.f32 0.5, %v947
            %v949 = vsub.f32 1.5, %v948
            %v950 = vmul.f32 %v945, %v949
            %vm951 = vweird.f32 %v830
            %vm952 = vweird.f32 %v945
            %vm953 = vmor %vm951, %vm952
            %v954 = vsel %vm953, %v945, %v950
            %v955 = vrsqrt.pop %v831
            %v956 = vmul.f32 %v955, %v831
            %v957 = vmul.f32 %v956, %v955
            %v958 = vmul.f32 0.5, %v957
            %v959 = vsub.f32 1.5, %v958
            %v960 = vmul.f32 %v955, %v959
            %vm961 = vweird.f32 %v831
            %vm962 = vweird.f32 %v955
            %vm963 = vmor %vm961, %vm962
            %v964 = vsel %vm963, %v955, %v960
            %v965 = vrsqrt.pop %v832
            %v966 = vmul.f32 %v965, %v832
            %v967 = vmul.f32 %v966, %v965
            %v968 = vmul.f32 0.5, %v967
            %v969 = vsub.f32 1.5, %v968
            %v970 = vmul.f32 %v965, %v969
            %vm971 = vweird.f32 %v832
            %vm972 = vweird.f32 %v965
            %vm973 = vmor %vm971, %vm972
            %v974 = vsel %vm973, %v965, %v970
            %v975 = vrsqrt.pop %v833
            %v976 = vmul.f32 %v975, %v833
            %v977 = vmul.f32 %v976, %v975
            %v978 = vmul.f32 0.5, %v977
            %v979 = vsub.f32 1.5, %v978
            %v980 = vmul.f32 %v975, %v979
            %vm981 = vweird.f32 %v833
            %vm982 = vweird.f32 %v975
            %vm983 = vmor %vm981, %vm982
            %v984 = vsel %vm983, %v975, %v980
            %v985 = vrsqrt.pop %v834
            %v986 = vmul.f32 %v985, %v834
            %v987 = vmul.f32 %v986, %v985
            %v988 = vmul.f32 0.5, %v987
            %v989 = vsub.f32 1.5, %v988
            %v990 = vmul.f32 %v985, %v989
            %vm991 = vweird.f32 %v834
            %vm992 = vweird.f32 %v985
            %vm993 = vmor %vm991, %vm992
            %v994 = vsel %vm993, %v985, %v990
            %v995 = vmul.f32 %v199, %v844
            %v996 = vmul.f32 %v200, %v854
            %v997 = vmul.f32 %v201, %v864
            %v998 = vmul.f32 %v202, %v874
            %v999 = vmul.f32 %v203, %v884
            %v1000 = vmul.f32 %v204, %v894
            %v1001 = vmul.f32 %v205, %v904
            %v1002 = vmul.f32 %v206, %v914
            %v1003 = vmul.f32 %v207, %v924
            %v1004 = vmul.f32 %v208, %v934
            %v1005 = vmul.f32 %v209, %v944
            %v1006 = vmul.f32 %v210, %v954
            %v1007 = vmul.f32 %v211, %v964
            %v1008 = vmul.f32 %v212, %v974
            %v1009 = vmul.f32 %v213, %v984
            %v1010 = vmul.f32 %v214, %v994
            %1027 = vrot.lane.b32.xlu0 %v995, 1
            %v1028 = vpop.permute.xlu0 %1027
            %1029 = vrot.lane.b32.xlu0 %v996, 1
            %v1030 = vpop.permute.xlu0 %1029
            %1031 = vrot.lane.b32.xlu0 %v997, 1
            %v1032 = vpop.permute.xlu0 %1031
            %1033 = vrot.lane.b32.xlu0 %v998, 1
            %v1034 = vpop.permute.xlu0 %1033
            %1035 = vrot.lane.b32.xlu0 %v999, 1
            %v1036 = vpop.permute.xlu0 %1035
            %1037 = vrot.lane.b32.xlu0 %v1000, 1
            %v1038 = vpop.permute.xlu0 %1037
            %1039 = vrot.lane.b32.xlu0 %v1001, 1
            %v1040 = vpop.permute.xlu0 %1039
            %1041 = vrot.lane.b32.xlu0 %v1002, 1
            %v1042 = vpop.permute.xlu0 %1041
            %1043 = vrot.lane.b32.xlu0 %v1003, 1
            %v1044 = vpop.permute.xlu0 %1043
            %1045 = vrot.lane.b32.xlu0 %v1004, 1
            %v1046 = vpop.permute.xlu0 %1045
            %1047 = vrot.lane.b32.xlu0 %v1005, 1
            %v1048 = vpop.permute.xlu0 %1047
            %1049 = vrot.lane.b32.xlu0 %v1006, 1
            %v1050 = vpop.permute.xlu0 %1049
            %1051 = vrot.lane.b32.xlu0 %v1007, 1
            %v1052 = vpop.permute.xlu0 %1051
            %1053 = vrot.lane.b32.xlu0 %v1008, 1
            %v1054 = vpop.permute.xlu0 %1053
            %1055 = vrot.lane.b32.xlu0 %v1009, 1
            %v1056 = vpop.permute.xlu0 %1055
            %1057 = vrot.lane.b32.xlu0 %v1010, 1
            %v1058 = vpop.permute.xlu0 %1057
            %vm1075 = vcmask 23568
            %1076 = vst.msk [vmem:[#allocation2] sm:$0xff] %vm1075, %v1028
            %1077 = vst.msk [vmem:[#allocation2 + $0x8] sm:$0xff] %vm1075, %v1030
            %1078 = vst.msk [vmem:[#allocation2 + $0x10] sm:$0xff] %vm1075, %v1032
            %1079 = vst.msk [vmem:[#allocation2 + $0x18] sm:$0xff] %vm1075, %v1034
            %1080 = vst.msk [vmem:[#allocation2 + $0x20] sm:$0xff] %vm1075, %v1036
            %1081 = vst.msk [vmem:[#allocation2 + $0x28] sm:$0xff] %vm1075, %v1038
            %1082 = vst.msk [vmem:[#allocation2 + $0x30] sm:$0xff] %vm1075, %v1040
            %1083 = vst.msk [vmem:[#allocation2 + $0x38] sm:$0xff] %vm1075, %v1042
            %1084 = vst.msk [vmem:[#allocation2 + $0x40] sm:$0xff] %vm1075, %v1044
            %1085 = vst.msk [vmem:[#allocation2 + $0x48] sm:$0xff] %vm1075, %v1046
            %1086 = vst.msk [vmem:[#allocation2 + $0x50] sm:$0xff] %vm1075, %v1048
            %1087 = vst.msk [vmem:[#allocation2 + $0x58] sm:$0xff] %vm1075, %v1050
            %1088 = vst.msk [vmem:[#allocation2 + $0x60] sm:$0xff] %vm1075, %v1052
            %1089 = vst.msk [vmem:[#allocation2 + $0x68] sm:$0xff] %vm1075, %v1054
            %1090 = vst.msk [vmem:[#allocation2 + $0x70] sm:$0xff] %vm1075, %v1056
            %1091 = vst.msk [vmem:[#allocation2 + $0x78] sm:$0xff] %vm1075, %v1058
            %1092 = vrot.lane.b32.xlu0 %v995, 127
            %v1093 = vpop.permute.xlu0 %1092
            %1094 = vrot.lane.b32.xlu0 %v996, 127
            %v1095 = vpop.permute.xlu0 %1094
            %1096 = vrot.lane.b32.xlu0 %v997, 127
            %v1097 = vpop.permute.xlu0 %1096
            %1098 = vrot.lane.b32.xlu0 %v998, 127
            %v1099 = vpop.permute.xlu0 %1098
            %1100 = vrot.lane.b32.xlu0 %v999, 127
            %v1101 = vpop.permute.xlu0 %1100
            %1102 = vrot.lane.b32.xlu0 %v1000, 127
            %v1103 = vpop.permute.xlu0 %1102
            %1104 = vrot.lane.b32.xlu0 %v1001, 127
            %v1105 = vpop.permute.xlu0 %1104
            %1106 = vrot.lane.b32.xlu0 %v1002, 127
            %v1107 = vpop.permute.xlu0 %1106
            %1108 = vrot.lane.b32.xlu0 %v1003, 127
            %v1109 = vpop.permute.xlu0 %1108
            %1110 = vrot.lane.b32.xlu0 %v1004, 127
            %v1111 = vpop.permute.xlu0 %1110
            %1112 = vrot.lane.b32.xlu0 %v1005, 127
            %v1113 = vpop.permute.xlu0 %1112
            %1114 = vrot.lane.b32.xlu0 %v1006, 127
            %v1115 = vpop.permute.xlu0 %1114
            %1116 = vrot.lane.b32.xlu0 %v1007, 127
            %v1117 = vpop.permute.xlu0 %1116
            %1118 = vrot.lane.b32.xlu0 %v1008, 127
            %v1119 = vpop.permute.xlu0 %1118
            %1120 = vrot.lane.b32.xlu0 %v1009, 127
            %v1121 = vpop.permute.xlu0 %1120
            %1122 = vrot.lane.b32.xlu0 %v1010, 127
            %v1123 = vpop.permute.xlu0 %1122
            %v1140 = vmul.f32 %v691, %v1093
            %v1141 = vmul.f32 %v692, %v1095
            %v1142 = vmul.f32 %v693, %v1097
            %v1143 = vmul.f32 %v694, %v1099
            %v1144 = vmul.f32 %v695, %v1101
            %v1145 = vmul.f32 %v696, %v1103
            %v1146 = vmul.f32 %v697, %v1105
            %v1147 = vmul.f32 %v698, %v1107
            %v1148 = vmul.f32 %v699, %v1109
            %v1149 = vmul.f32 %v700, %v1111
            %v1150 = vmul.f32 %v701, %v1113
            %v1151 = vmul.f32 %v702, %v1115
            %v1152 = vmul.f32 %v703, %v1117
            %v1153 = vmul.f32 %v704, %v1119
            %v1154 = vmul.f32 %v705, %v1121
            %v1155 = vmul.f32 %v706, %v1123
            %1172 = vrot.lane.b32.xlu0 %v1140, 2
            %v1173 = vpop.permute.xlu0 %1172
            %1174 = vrot.lane.b32.xlu0 %v1141, 2
            %v1175 = vpop.permute.xlu0 %1174
            %1176 = vrot.lane.b32.xlu0 %v1142, 2
            %v1177 = vpop.permute.xlu0 %1176
            %1178 = vrot.lane.b32.xlu0 %v1143, 2
            %v1179 = vpop.permute.xlu0 %1178
            %1180 = vrot.lane.b32.xlu0 %v1144, 2
            %v1181 = vpop.permute.xlu0 %1180
            %1182 = vrot.lane.b32.xlu0 %v1145, 2
            %v1183 = vpop.permute.xlu0 %1182
            %1184 = vrot.lane.b32.xlu0 %v1146, 2
            %v1185 = vpop.permute.xlu0 %1184
            %1186 = vrot.lane.b32.xlu0 %v1147, 2
            %v1187 = vpop.permute.xlu0 %1186
            %1188 = vrot.lane.b32.xlu0 %v1148, 2
            %v1189 = vpop.permute.xlu0 %1188
            %1190 = vrot.lane.b32.xlu0 %v1149, 2
            %v1191 = vpop.permute.xlu0 %1190
            %1192 = vrot.lane.b32.xlu0 %v1150, 2
            %v1193 = vpop.permute.xlu0 %1192
            %1194 = vrot.lane.b32.xlu0 %v1151, 2
            %v1195 = vpop.permute.xlu0 %1194
            %1196 = vrot.lane.b32.xlu0 %v1152, 2
            %v1197 = vpop.permute.xlu0 %1196
            %1198 = vrot.lane.b32.xlu0 %v1153, 2
            %v1199 = vpop.permute.xlu0 %1198
            %1200 = vrot.lane.b32.xlu0 %v1154, 2
            %v1201 = vpop.permute.xlu0 %1200
            %1202 = vrot.lane.b32.xlu0 %v1155, 2
            %v1203 = vpop.permute.xlu0 %1202
            %v1220 = vsub.f32 %v199, %v1173
            %v1221 = vsub.f32 %v200, %v1175
            %v1222 = vsub.f32 %v201, %v1177
            %v1223 = vsub.f32 %v202, %v1179
            %v1224 = vsub.f32 %v203, %v1181
            %v1225 = vsub.f32 %v204, %v1183
            %v1226 = vsub.f32 %v205, %v1185
            %v1227 = vsub.f32 %v206, %v1187
            %v1228 = vsub.f32 %v207, %v1189
            %v1229 = vsub.f32 %v208, %v1191
            %v1230 = vsub.f32 %v209, %v1193
            %v1231 = vsub.f32 %v210, %v1195
            %v1232 = vsub.f32 %v211, %v1197
            %v1233 = vsub.f32 %v212, %v1199
            %v1234 = vsub.f32 %v213, %v1201
            %v1235 = vsub.f32 %v214, %v1203
            %1252 = vrot.lane.b32.xlu0 %v1220, 1
            %v1253 = vpop.permute.xlu0 %1252
            %1254 = vrot.lane.b32.xlu0 %v1221, 1
            %v1255 = vpop.permute.xlu0 %1254
            %1256 = vrot.lane.b32.xlu0 %v1222, 1
            %v1257 = vpop.permute.xlu0 %1256
            %1258 = vrot.lane.b32.xlu0 %v1223, 1
            %v1259 = vpop.permute.xlu0 %1258
            %1260 = vrot.lane.b32.xlu0 %v1224, 1
            %v1261 = vpop.permute.xlu0 %1260
            %1262 = vrot.lane.b32.xlu0 %v1225, 1
            %v1263 = vpop.permute.xlu0 %1262
            %1264 = vrot.lane.b32.xlu0 %v1226, 1
            %v1265 = vpop.permute.xlu0 %1264
            %1266 = vrot.lane.b32.xlu0 %v1227, 1
            %v1267 = vpop.permute.xlu0 %1266
            %1268 = vrot.lane.b32.xlu0 %v1228, 1
            %v1269 = vpop.permute.xlu0 %1268
            %1270 = vrot.lane.b32.xlu0 %v1229, 1
            %v1271 = vpop.permute.xlu0 %1270
            %1272 = vrot.lane.b32.xlu0 %v1230, 1
            %v1273 = vpop.permute.xlu0 %1272
            %1274 = vrot.lane.b32.xlu0 %v1231, 1
            %v1275 = vpop.permute.xlu0 %1274
            %1276 = vrot.lane.b32.xlu0 %v1232, 1
            %v1277 = vpop.permute.xlu0 %1276
            %1278 = vrot.lane.b32.xlu0 %v1233, 1
            %v1279 = vpop.permute.xlu0 %1278
            %1280 = vrot.lane.b32.xlu0 %v1234, 1
            %v1281 = vpop.permute.xlu0 %1280
            %1282 = vrot.lane.b32.xlu0 %v1235, 1
            %v1283 = vpop.permute.xlu0 %1282
            %vm1300 = vcmask 31768
            %1301 = vst.msk [vmem:[#allocation2] sm:$0xff] %vm1300, %v1253
            %1302 = vst.msk [vmem:[#allocation2 + $0x8] sm:$0xff] %vm1300, %v1255
            %1303 = vst.msk [vmem:[#allocation2 + $0x10] sm:$0xff] %vm1300, %v1257
            %1304 = vst.msk [vmem:[#allocation2 + $0x18] sm:$0xff] %vm1300, %v1259
            %1305 = vst.msk [vmem:[#allocation2 + $0x20] sm:$0xff] %vm1300, %v1261
            %1306 = vst.msk [vmem:[#allocation2 + $0x28] sm:$0xff] %vm1300, %v1263
            %1307 = vst.msk [vmem:[#allocation2 + $0x30] sm:$0xff] %vm1300, %v1265
            %1308 = vst.msk [vmem:[#allocation2 + $0x38] sm:$0xff] %vm1300, %v1267
            %1309 = vst.msk [vmem:[#allocation2 + $0x40] sm:$0xff] %vm1300, %v1269
            %1310 = vst.msk [vmem:[#allocation2 + $0x48] sm:$0xff] %vm1300, %v1271
            %1311 = vst.msk [vmem:[#allocation2 + $0x50] sm:$0xff] %vm1300, %v1273
            %1312 = vst.msk [vmem:[#allocation2 + $0x58] sm:$0xff] %vm1300, %v1275
            %1313 = vst.msk [vmem:[#allocation2 + $0x60] sm:$0xff] %vm1300, %v1277
            %1314 = vst.msk [vmem:[#allocation2 + $0x68] sm:$0xff] %vm1300, %v1279
            %1315 = vst.msk [vmem:[#allocation2 + $0x70] sm:$0xff] %vm1300, %v1281
            %1316 = vst.msk [vmem:[#allocation2 + $0x78] sm:$0xff] %vm1300, %v1283
          $region48: #{tpu_custom_call.1} parent=39 // pred_fallthru
            _
        $region40: #{tpu_custom_call.1} parent=35 // pred_fallthru
          _
        %p1317 = scmp.eq.s32.totalorder %s20, 1
        // Predicated region
        $region49: #{tpu_custom_call.1} parent=35 // pred_check
          %p1318 = pneg %p1317
        $region50: #{tpu_custom_call.1} parent=35 // pred_check_branch
          %1320 = sbr.rel (%p1318) target = $region52
        $region51: #{tpu_custom_call.1} parent=35 // pred_region
          %v1321 = vld [vmem:[#allocation2] sm:$0xff]
          %v1322 = vld [vmem:[#allocation2 + $0x8] sm:$0xff]
          %v1323 = vld [vmem:[#allocation2 + $0x10] sm:$0xff]
          %v1324 = vld [vmem:[#allocation2 + $0x18] sm:$0xff]
          %v1325 = vld [vmem:[#allocation2 + $0x20] sm:$0xff]
          %v1326 = vld [vmem:[#allocation2 + $0x28] sm:$0xff]
          %v1327 = vld [vmem:[#allocation2 + $0x30] sm:$0xff]
          %v1328 = vld [vmem:[#allocation2 + $0x38] sm:$0xff]
          %v1329 = vld [vmem:[#allocation2 + $0x40] sm:$0xff]
          %v1330 = vld [vmem:[#allocation2 + $0x48] sm:$0xff]
          %v1331 = vld [vmem:[#allocation2 + $0x50] sm:$0xff]
          %v1332 = vld [vmem:[#allocation2 + $0x58] sm:$0xff]
          %v1333 = vld [vmem:[#allocation2 + $0x60] sm:$0xff]
          %v1334 = vld [vmem:[#allocation2 + $0x68] sm:$0xff]
          %v1335 = vld [vmem:[#allocation2 + $0x70] sm:$0xff]
          %v1336 = vld [vmem:[#allocation2 + $0x78] sm:$0xff]
          %1338 = vset.pattern.permute.xlu0 2
          %1339 = vperm.xlu0 %1338, %v1321
          %v1340 = vpop.permute.xlu0 %1339
          %1343 = vset.pattern.permute.xlu0 2
          %1344 = vperm.xlu0 %1343, %v1322
          %v1345 = vpop.permute.xlu0 %1344
          %1348 = vset.pattern.permute.xlu0 2
          %1349 = vperm.xlu0 %1348, %v1323
          %v1350 = vpop.permute.xlu0 %1349
          %1353 = vset.pattern.permute.xlu0 2
          %1354 = vperm.xlu0 %1353, %v1324
          %v1355 = vpop.permute.xlu0 %1354
          %1358 = vset.pattern.permute.xlu0 2
          %1359 = vperm.xlu0 %1358, %v1325
          %v1360 = vpop.permute.xlu0 %1359
          %1363 = vset.pattern.permute.xlu0 2
          %1364 = vperm.xlu0 %1363, %v1326
          %v1365 = vpop.permute.xlu0 %1364
          %1368 = vset.pattern.permute.xlu0 2
          %1369 = vperm.xlu0 %1368, %v1327
          %v1370 = vpop.permute.xlu0 %1369
          %1373 = vset.pattern.permute.xlu0 2
          %1374 = vperm.xlu0 %1373, %v1328
          %v1375 = vpop.permute.xlu0 %1374
          %1378 = vset.pattern.permute.xlu0 2
          %1379 = vperm.xlu0 %1378, %v1329
          %v1380 = vpop.permute.xlu0 %1379
          %1383 = vset.pattern.permute.xlu0 2
          %1384 = vperm.xlu0 %1383, %v1330
          %v1385 = vpop.permute.xlu0 %1384
          %1388 = vset.pattern.permute.xlu0 2
          %1389 = vperm.xlu0 %1388, %v1331
          %v1390 = vpop.permute.xlu0 %1389
          %1393 = vset.pattern.permute.xlu0 2
          %1394 = vperm.xlu0 %1393, %v1332
          %v1395 = vpop.permute.xlu0 %1394
          %1398 = vset.pattern.permute.xlu0 2
          %1399 = vperm.xlu0 %1398, %v1333
          %v1400 = vpop.permute.xlu0 %1399
          %1403 = vset.pattern.permute.xlu0 2
          %1404 = vperm.xlu0 %1403, %v1334
          %v1405 = vpop.permute.xlu0 %1404
          %1408 = vset.pattern.permute.xlu0 2
          %1409 = vperm.xlu0 %1408, %v1335
          %v1410 = vpop.permute.xlu0 %1409
          %1413 = vset.pattern.permute.xlu0 2
          %1414 = vperm.xlu0 %1413, %v1336
          %v1415 = vpop.permute.xlu0 %1414
          %v1417 = vmul.f32 %v438, %v1340
          %v1418 = vmul.f32 %v439, %v1345
          %v1419 = vmul.f32 %v440, %v1350
          %v1420 = vmul.f32 %v441, %v1355
          %v1421 = vmul.f32 %v442, %v1360
          %v1422 = vmul.f32 %v443, %v1365
          %v1423 = vmul.f32 %v444, %v1370
          %v1424 = vmul.f32 %v445, %v1375
          %v1425 = vmul.f32 %v446, %v1380
          %v1426 = vmul.f32 %v447, %v1385
          %v1427 = vmul.f32 %v448, %v1390
          %v1428 = vmul.f32 %v449, %v1395
          %v1429 = vmul.f32 %v450, %v1400
          %v1430 = vmul.f32 %v451, %v1405
          %v1431 = vmul.f32 %v452, %v1410
          %v1432 = vmul.f32 %v453, %v1415
          %1433 = vset.pattern.permute.xlu0 3
          %1434 = vperm.xlu0 %1433, %v1321
          %v1435 = vpop.permute.xlu0 %1434
          %1437 = vset.pattern.permute.xlu0 3
          %1438 = vperm.xlu0 %1437, %v1322
          %v1439 = vpop.permute.xlu0 %1438
          %1441 = vset.pattern.permute.xlu0 3
          %1442 = vperm.xlu0 %1441, %v1323
          %v1443 = vpop.permute.xlu0 %1442
          %1445 = vset.pattern.permute.xlu0 3
          %1446 = vperm.xlu0 %1445, %v1324
          %v1447 = vpop.permute.xlu0 %1446
          %1449 = vset.pattern.permute.xlu0 3
          %1450 = vperm.xlu0 %1449, %v1325
          %v1451 = vpop.permute.xlu0 %1450
          %1453 = vset.pattern.permute.xlu0 3
          %1454 = vperm.xlu0 %1453, %v1326
          %v1455 = vpop.permute.xlu0 %1454
          %1457 = vset.pattern.permute.xlu0 3
          %1458 = vperm.xlu0 %1457, %v1327
          %v1459 = vpop.permute.xlu0 %1458
          %1461 = vset.pattern.permute.xlu0 3
          %1462 = vperm.xlu0 %1461, %v1328
          %v1463 = vpop.permute.xlu0 %1462
          %1465 = vset.pattern.permute.xlu0 3
          %1466 = vperm.xlu0 %1465, %v1329
          %v1467 = vpop.permute.xlu0 %1466
          %1469 = vset.pattern.permute.xlu0 3
          %1470 = vperm.xlu0 %1469, %v1330
          %v1471 = vpop.permute.xlu0 %1470
          %1473 = vset.pattern.permute.xlu0 3
          %1474 = vperm.xlu0 %1473, %v1331
          %v1475 = vpop.permute.xlu0 %1474
          %1477 = vset.pattern.permute.xlu0 3
          %1478 = vperm.xlu0 %1477, %v1332
          %v1479 = vpop.permute.xlu0 %1478
          %1481 = vset.pattern.permute.xlu0 3
          %1482 = vperm.xlu0 %1481, %v1333
          %v1483 = vpop.permute.xlu0 %1482
          %1485 = vset.pattern.permute.xlu0 3
          %1486 = vperm.xlu0 %1485, %v1334
          %v1487 = vpop.permute.xlu0 %1486
          %1489 = vset.pattern.permute.xlu0 3
          %1490 = vperm.xlu0 %1489, %v1335
          %v1491 = vpop.permute.xlu0 %1490
          %1493 = vset.pattern.permute.xlu0 3
          %1494 = vperm.xlu0 %1493, %v1336
          %v1495 = vpop.permute.xlu0 %1494
          %v1497 = vadd.f32 %v1417, %v1435
          %v1498 = vadd.f32 %v1418, %v1439
          %v1499 = vadd.f32 %v1419, %v1443
          %v1500 = vadd.f32 %v1420, %v1447
          %v1501 = vadd.f32 %v1421, %v1451
          %v1502 = vadd.f32 %v1422, %v1455
          %v1503 = vadd.f32 %v1423, %v1459
          %v1504 = vadd.f32 %v1424, %v1463
          %v1505 = vadd.f32 %v1425, %v1467
          %v1506 = vadd.f32 %v1426, %v1471
          %v1507 = vadd.f32 %v1427, %v1475
          %v1508 = vadd.f32 %v1428, %v1479
          %v1509 = vadd.f32 %v1429, %v1483
          %v1510 = vadd.f32 %v1430, %v1487
          %v1511 = vadd.f32 %v1431, %v1491
          %v1512 = vadd.f32 %v1432, %v1495
          %v1513 = vpack.c.bf16 %v1498, %v1497
          %v1514 = vpack.c.bf16 %v1500, %v1499
          %v1515 = vpack.c.bf16 %v1502, %v1501
          %v1516 = vpack.c.bf16 %v1504, %v1503
          %v1517 = vpack.c.bf16 %v1506, %v1505
          %v1518 = vpack.c.bf16 %v1508, %v1507
          %v1519 = vpack.c.bf16 %v1510, %v1509
          %v1520 = vpack.c.bf16 %v1512, %v1511
          %v1521 = vld [vmem:[%s2] sm:$0xf]
          %v1522 = vld [vmem:[%s2 + $0x4] sm:$0xf]
          %v1523 = vld [vmem:[%s2 + $0x8] sm:$0xf]
          %v1524 = vld [vmem:[%s2 + $0xc] sm:$0xf]
          %v1525 = vld [vmem:[%s2 + $0x10] sm:$0xf]
          %v1526 = vld [vmem:[%s2 + $0x14] sm:$0xf]
          %v1527 = vld [vmem:[%s2 + $0x18] sm:$0xf]
          %v1528 = vld [vmem:[%s2 + $0x1c] sm:$0xf]
          %v1529 = vld [vmem:[%s2 + $0x20] sm:$0xf]
          %v1530 = vld [vmem:[%s2 + $0x24] sm:$0xf]
          %v1531 = vld [vmem:[%s2 + $0x28] sm:$0xf]
          %v1532 = vld [vmem:[%s2 + $0x2c] sm:$0xf]
          %v1533 = vld [vmem:[%s2 + $0x30] sm:$0xf]
          %v1534 = vld [vmem:[%s2 + $0x34] sm:$0xf]
          %v1535 = vld [vmem:[%s2 + $0x38] sm:$0xf]
          %v1536 = vld [vmem:[%s2 + $0x3c] sm:$0xf]
          %1537 = vset.pattern.permute.xlu0 3
          %1538 = vperm.xlu0 %1537, %v199
          %v1539 = vpop.permute.xlu0 %1538
          %1541 = vset.pattern.permute.xlu0 3
          %1542 = vperm.xlu0 %1541, %v200
          %v1543 = vpop.permute.xlu0 %1542
          %1545 = vset.pattern.permute.xlu0 3
          %1546 = vperm.xlu0 %1545, %v201
          %v1547 = vpop.permute.xlu0 %1546
          %1549 = vset.pattern.permute.xlu0 3
          %1550 = vperm.xlu0 %1549, %v202
          %v1551 = vpop.permute.xlu0 %1550
          %1553 = vset.pattern.permute.xlu0 3
          %1554 = vperm.xlu0 %1553, %v203
          %v1555 = vpop.permute.xlu0 %1554
          %1557 = vset.pattern.permute.xlu0 3
          %1558 = vperm.xlu0 %1557, %v204
          %v1559 = vpop.permute.xlu0 %1558
          %1561 = vset.pattern.permute.xlu0 3
          %1562 = vperm.xlu0 %1561, %v205
          %v1563 = vpop.permute.xlu0 %1562
          %1565 = vset.pattern.permute.xlu0 3
          %1566 = vperm.xlu0 %1565, %v206
          %v1567 = vpop.permute.xlu0 %1566
          %1569 = vset.pattern.permute.xlu0 3
          %1570 = vperm.xlu0 %1569, %v207
          %v1571 = vpop.permute.xlu0 %1570
          %1573 = vset.pattern.permute.xlu0 3
          %1574 = vperm.xlu0 %1573, %v208
          %v1575 = vpop.permute.xlu0 %1574
          %1577 = vset.pattern.permute.xlu0 3
          %1578 = vperm.xlu0 %1577, %v209
          %v1579 = vpop.permute.xlu0 %1578
          %1581 = vset.pattern.permute.xlu0 3
          %1582 = vperm.xlu0 %1581, %v210
          %v1583 = vpop.permute.xlu0 %1582
          %1585 = vset.pattern.permute.xlu0 3
          %1586 = vperm.xlu0 %1585, %v211
          %v1587 = vpop.permute.xlu0 %1586
          %1589 = vset.pattern.permute.xlu0 3
          %1590 = vperm.xlu0 %1589, %v212
          %v1591 = vpop.permute.xlu0 %1590
          %1593 = vset.pattern.permute.xlu0 3
          %1594 = vperm.xlu0 %1593, %v213
          %v1595 = vpop.permute.xlu0 %1594
          %1597 = vset.pattern.permute.xlu0 3
          %1598 = vperm.xlu0 %1597, %v214
          %v1599 = vpop.permute.xlu0 %1598
          %v1617 = vunpack.c.l.b16 %v1521
          %v1618 = vunpack.c.l.b16 %v1522
          %v1619 = vunpack.c.l.b16 %v1523
          %v1620 = vunpack.c.l.b16 %v1524
          %v1621 = vunpack.c.l.b16 %v1525
          %v1622 = vunpack.c.l.b16 %v1526
          %v1623 = vunpack.c.l.b16 %v1527
          %v1624 = vunpack.c.l.b16 %v1528
          %v1625 = vunpack.c.l.b16 %v1529
          %v1626 = vunpack.c.l.b16 %v1530
          %v1627 = vunpack.c.l.b16 %v1531
          %v1628 = vunpack.c.l.b16 %v1532
          %v1629 = vunpack.c.l.b16 %v1533
          %v1630 = vunpack.c.l.b16 %v1534
          %v1631 = vunpack.c.l.b16 %v1535
          %v1632 = vunpack.c.l.b16 %v1536
          %v1633 = vpack.c.b16 %v1618, %v1617
          %v1634 = vpack.c.b16 %v1620, %v1619
          %v1635 = vpack.c.b16 %v1622, %v1621
          %v1636 = vpack.c.b16 %v1624, %v1623
          %v1637 = vpack.c.b16 %v1626, %v1625
          %v1638 = vpack.c.b16 %v1628, %v1627
          %v1639 = vpack.c.b16 %v1630, %v1629
          %v1640 = vpack.c.b16 %v1632, %v1631
          %1649 = vmatpush.bf16.msra.mxu0 %v1520
          %1650 = vmatpush.bf16.msra.mxu0 %v1519
          %1651 = vmatpush.bf16.msra.mxu0 %v1518
          %1652 = vmatpush.bf16.msra.mxu0 %v1517
          %1653 = vmatpush.bf16.msra.mxu0 %v1516
          %1654 = vmatpush.bf16.msra.mxu0 %v1515
          %1655 = vmatpush.bf16.msra.mxu0 %v1514
          %1656 = vmatpush.bf16.msra.mxu0 %v1513
          %1657 = vmatmul.bf16.gmra.mxu0 %v1633
          %v1658 = vpop.f32.mrf.mxu0
          %v1659 = vadd.f32 %v1539, %v1658
          %v1660 = vpop.f32.mrf.mxu0
          %v1661 = vadd.f32 %v1543, %v1660
          %1662 = vmatmul.bf16.gmra.mxu0 %v1634
          %v1663 = vpop.f32.mrf.mxu0
          %v1664 = vadd.f32 %v1547, %v1663
          %v1665 = vpop.f32.mrf.mxu0
          %v1666 = vadd.f32 %v1551, %v1665
          %1667 = vmatmul.bf16.gmra.mxu0 %v1635
          %v1668 = vpop.f32.mrf.mxu0
          %v1669 = vadd.f32 %v1555, %v1668
          %v1670 = vpop.f32.mrf.mxu0
          %v1671 = vadd.f32 %v1559, %v1670
          %1672 = vmatmul.bf16.gmra.mxu0 %v1636
          %v1673 = vpop.f32.mrf.mxu0
          %v1674 = vadd.f32 %v1563, %v1673
          %v1675 = vpop.f32.mrf.mxu0
          %v1676 = vadd.f32 %v1567, %v1675
          %1677 = vmatmul.bf16.gmra.mxu0 %v1637
          %v1678 = vpop.f32.mrf.mxu0
          %v1679 = vadd.f32 %v1571, %v1678
          %v1680 = vpop.f32.mrf.mxu0
          %v1681 = vadd.f32 %v1575, %v1680
          %1682 = vmatmul.bf16.gmra.mxu0 %v1638
          %v1683 = vpop.f32.mrf.mxu0
          %v1684 = vadd.f32 %v1579, %v1683
          %v1685 = vpop.f32.mrf.mxu0
          %v1686 = vadd.f32 %v1583, %v1685
          %1687 = vmatmul.bf16.gmra.mxu0 %v1639
          %v1688 = vpop.f32.mrf.mxu0
          %v1689 = vadd.f32 %v1587, %v1688
          %v1690 = vpop.f32.mrf.mxu0
          %v1691 = vadd.f32 %v1591, %v1690
          %1692 = vmatmul.bf16.gmra.mxu0 %v1640
          %v1693 = vpop.f32.mrf.mxu0
          %v1694 = vadd.f32 %v1595, %v1693
          %v1695 = vpop.f32.mrf.mxu0
          %v1696 = vadd.f32 %v1599, %v1695
          %1697 = vdwg.mxu0
          %v1698 = vmax.f32 %v1659, 0.0
          %v1699 = vmax.f32 %v1661, 0.0
          %v1700 = vmax.f32 %v1664, 0.0
          %v1701 = vmax.f32 %v1666, 0.0
          %v1702 = vmax.f32 %v1669, 0.0
          %v1703 = vmax.f32 %v1671, 0.0
          %v1704 = vmax.f32 %v1674, 0.0
          %v1705 = vmax.f32 %v1676, 0.0
          %v1706 = vmax.f32 %v1679, 0.0
          %v1707 = vmax.f32 %v1681, 0.0
          %v1708 = vmax.f32 %v1684, 0.0
          %v1709 = vmax.f32 %v1686, 0.0
          %v1710 = vmax.f32 %v1689, 0.0
          %v1711 = vmax.f32 %v1691, 0.0
          %v1712 = vmax.f32 %v1694, 0.0
          %v1713 = vmax.f32 %v1696, 0.0
          %v1714 = vmul.f32 %v1698, %v222
          %v1715 = vmul.f32 %v1699, %v222
          %v1716 = vmul.f32 %v1700, %v222
          %v1717 = vmul.f32 %v1701, %v222
          %v1718 = vmul.f32 %v1702, %v222
          %v1719 = vmul.f32 %v1703, %v222
          %v1720 = vmul.f32 %v1704, %v222
          %v1721 = vmul.f32 %v1705, %v222
          %v1722 = vmul.f32 %v1706, %v222
          %v1723 = vmul.f32 %v1707, %v222
          %v1724 = vmul.f32 %v1708, %v222
          %v1725 = vmul.f32 %v1709, %v222
          %v1726 = vmul.f32 %v1710, %v222
          %v1727 = vmul.f32 %v1711, %v222
          %v1728 = vmul.f32 %v1712, %v222
          %v1729 = vmul.f32 %v1713, %v222
          %1730 = vadd.xlane.f32.xlu0 %v1714
          %v1731 = vpop.xlane.xlu0 %1730
          %1732 = vadd.xlane.f32.xlu0 %v1715
          %v1733 = vpop.xlane.xlu0 %1732
          %1734 = vadd.xlane.f32.xlu0 %v1716
          %v1735 = vpop.xlane.xlu0 %1734
          %1736 = vadd.xlane.f32.xlu0 %v1717
          %v1737 = vpop.xlane.xlu0 %1736
          %1738 = vadd.xlane.f32.xlu0 %v1718
          %v1739 = vpop.xlane.xlu0 %1738
          %1740 = vadd.xlane.f32.xlu0 %v1719
          %v1741 = vpop.xlane.xlu0 %1740
          %1742 = vadd.xlane.f32.xlu0 %v1720
          %v1743 = vpop.xlane.xlu0 %1742
          %1744 = vadd.xlane.f32.xlu0 %v1721
          %v1745 = vpop.xlane.xlu0 %1744
          %1746 = vadd.xlane.f32.xlu0 %v1722
          %v1747 = vpop.xlane.xlu0 %1746
          %1748 = vadd.xlane.f32.xlu0 %v1723
          %v1749 = vpop.xlane.xlu0 %1748
          %1750 = vadd.xlane.f32.xlu0 %v1724
          %v1751 = vpop.xlane.xlu0 %1750
          %1752 = vadd.xlane.f32.xlu0 %v1725
          %v1753 = vpop.xlane.xlu0 %1752
          %1754 = vadd.xlane.f32.xlu0 %v1726
          %v1755 = vpop.xlane.xlu0 %1754
          %1756 = vadd.xlane.f32.xlu0 %v1727
          %v1757 = vpop.xlane.xlu0 %1756
          %1758 = vadd.xlane.f32.xlu0 %v1728
          %v1759 = vpop.xlane.xlu0 %1758
          %1760 = vadd.xlane.f32.xlu0 %v1729
          %v1761 = vpop.xlane.xlu0 %1760
          %v1762 = vadd.f32 %v1321, %v1731
          %v1763 = vadd.f32 %v1322, %v1733
          %v1764 = vadd.f32 %v1323, %v1735
          %v1765 = vadd.f32 %v1324, %v1737
          %v1766 = vadd.f32 %v1325, %v1739
          %v1767 = vadd.f32 %v1326, %v1741
          %v1768 = vadd.f32 %v1327, %v1743
          %v1769 = vadd.f32 %v1328, %v1745
          %v1770 = vadd.f32 %v1329, %v1747
          %v1771 = vadd.f32 %v1330, %v1749
          %v1772 = vadd.f32 %v1331, %v1751
          %v1773 = vadd.f32 %v1332, %v1753
          %v1774 = vadd.f32 %v1333, %v1755
          %v1775 = vadd.f32 %v1334, %v1757
          %v1776 = vadd.f32 %v1335, %v1759
          %v1777 = vadd.f32 %v1336, %v1761
          %vm1778 = vcmask 39968
          %1779 = vst.msk [vmem:[#allocation2] sm:$0xff] %vm1778, %v1762
          %1780 = vst.msk [vmem:[#allocation2 + $0x8] sm:$0xff] %vm1778, %v1763
          %1781 = vst.msk [vmem:[#allocation2 + $0x10] sm:$0xff] %vm1778, %v1764
          %1782 = vst.msk [vmem:[#allocation2 + $0x18] sm:$0xff] %vm1778, %v1765
          %1783 = vst.msk [vmem:[#allocation2 + $0x20] sm:$0xff] %vm1778, %v1766
          %1784 = vst.msk [vmem:[#allocation2 + $0x28] sm:$0xff] %vm1778, %v1767
          %1785 = vst.msk [vmem:[#allocation2 + $0x30] sm:$0xff] %vm1778, %v1768
          %1786 = vst.msk [vmem:[#allocation2 + $0x38] sm:$0xff] %vm1778, %v1769
          %1787 = vst.msk [vmem:[#allocation2 + $0x40] sm:$0xff] %vm1778, %v1770
          %1788 = vst.msk [vmem:[#allocation2 + $0x48] sm:$0xff] %vm1778, %v1771
          %1789 = vst.msk [vmem:[#allocation2 + $0x50] sm:$0xff] %vm1778, %v1772
          %1790 = vst.msk [vmem:[#allocation2 + $0x58] sm:$0xff] %vm1778, %v1773
          %1791 = vst.msk [vmem:[#allocation2 + $0x60] sm:$0xff] %vm1778, %v1774
          %1792 = vst.msk [vmem:[#allocation2 + $0x68] sm:$0xff] %vm1778, %v1775
          %1793 = vst.msk [vmem:[#allocation2 + $0x70] sm:$0xff] %vm1778, %v1776
          %1794 = vst.msk [vmem:[#allocation2 + $0x78] sm:$0xff] %vm1778, %v1777
          %v1795 = vld [vmem:[#allocation2] sm:$0xff]
          %v1796 = vld [vmem:[#allocation2 + $0x8] sm:$0xff]
          %v1797 = vld [vmem:[#allocation2 + $0x10] sm:$0xff]
          %v1798 = vld [vmem:[#allocation2 + $0x18] sm:$0xff]
          %v1799 = vld [vmem:[#allocation2 + $0x20] sm:$0xff]
          %v1800 = vld [vmem:[#allocation2 + $0x28] sm:$0xff]
          %v1801 = vld [vmem:[#allocation2 + $0x30] sm:$0xff]
          %v1802 = vld [vmem:[#allocation2 + $0x38] sm:$0xff]
          %v1803 = vld [vmem:[#allocation2 + $0x40] sm:$0xff]
          %v1804 = vld [vmem:[#allocation2 + $0x48] sm:$0xff]
          %v1805 = vld [vmem:[#allocation2 + $0x50] sm:$0xff]
          %v1806 = vld [vmem:[#allocation2 + $0x58] sm:$0xff]
          %v1807 = vld [vmem:[#allocation2 + $0x60] sm:$0xff]
          %v1808 = vld [vmem:[#allocation2 + $0x68] sm:$0xff]
          %v1809 = vld [vmem:[#allocation2 + $0x70] sm:$0xff]
          %v1810 = vld [vmem:[#allocation2 + $0x78] sm:$0xff]
          %v1811 = vmul.f32 %v1714, %v1714
          %v1812 = vmul.f32 %v1715, %v1715
          %v1813 = vmul.f32 %v1716, %v1716
          %v1814 = vmul.f32 %v1717, %v1717
          %v1815 = vmul.f32 %v1718, %v1718
          %v1816 = vmul.f32 %v1719, %v1719
          %v1817 = vmul.f32 %v1720, %v1720
          %v1818 = vmul.f32 %v1721, %v1721
          %v1819 = vmul.f32 %v1722, %v1722
          %v1820 = vmul.f32 %v1723, %v1723
          %v1821 = vmul.f32 %v1724, %v1724
          %v1822 = vmul.f32 %v1725, %v1725
          %v1823 = vmul.f32 %v1726, %v1726
          %v1824 = vmul.f32 %v1727, %v1727
          %v1825 = vmul.f32 %v1728, %v1728
          %v1826 = vmul.f32 %v1729, %v1729
          %1827 = vadd.xlane.f32.xlu0 %v1811
          %v1828 = vpop.xlane.xlu0 %1827
          %1829 = vadd.xlane.f32.xlu0 %v1812
          %v1830 = vpop.xlane.xlu0 %1829
          %1831 = vadd.xlane.f32.xlu0 %v1813
          %v1832 = vpop.xlane.xlu0 %1831
          %1833 = vadd.xlane.f32.xlu0 %v1814
          %v1834 = vpop.xlane.xlu0 %1833
          %1835 = vadd.xlane.f32.xlu0 %v1815
          %v1836 = vpop.xlane.xlu0 %1835
          %1837 = vadd.xlane.f32.xlu0 %v1816
          %v1838 = vpop.xlane.xlu0 %1837
          %1839 = vadd.xlane.f32.xlu0 %v1817
          %v1840 = vpop.xlane.xlu0 %1839
          %1841 = vadd.xlane.f32.xlu0 %v1818
          %v1842 = vpop.xlane.xlu0 %1841
          %1843 = vadd.xlane.f32.xlu0 %v1819
          %v1844 = vpop.xlane.xlu0 %1843
          %1845 = vadd.xlane.f32.xlu0 %v1820
          %v1846 = vpop.xlane.xlu0 %1845
          %1847 = vadd.xlane.f32.xlu0 %v1821
          %v1848 = vpop.xlane.xlu0 %1847
          %1849 = vadd.xlane.f32.xlu0 %v1822
          %v1850 = vpop.xlane.xlu0 %1849
          %1851 = vadd.xlane.f32.xlu0 %v1823
          %v1852 = vpop.xlane.xlu0 %1851
          %1853 = vadd.xlane.f32.xlu0 %v1824
          %v1854 = vpop.xlane.xlu0 %1853
          %1855 = vadd.xlane.f32.xlu0 %v1825
          %v1856 = vpop.xlane.xlu0 %1855
          %1857 = vadd.xlane.f32.xlu0 %v1826
          %v1858 = vpop.xlane.xlu0 %1857
          %v1859 = vadd.f32 %v1795, %v1828
          %v1860 = vadd.f32 %v1796, %v1830
          %v1861 = vadd.f32 %v1797, %v1832
          %v1862 = vadd.f32 %v1798, %v1834
          %v1863 = vadd.f32 %v1799, %v1836
          %v1864 = vadd.f32 %v1800, %v1838
          %v1865 = vadd.f32 %v1801, %v1840
          %v1866 = vadd.f32 %v1802, %v1842
          %v1867 = vadd.f32 %v1803, %v1844
          %v1868 = vadd.f32 %v1804, %v1846
          %v1869 = vadd.f32 %v1805, %v1848
          %v1870 = vadd.f32 %v1806, %v1850
          %v1871 = vadd.f32 %v1807, %v1852
          %v1872 = vadd.f32 %v1808, %v1854
          %v1873 = vadd.f32 %v1809, %v1856
          %v1874 = vadd.f32 %v1810, %v1858
          %vm1875 = vcmask 48168
          %1876 = vst.msk [vmem:[#allocation2] sm:$0xff] %vm1875, %v1859
          %1877 = vst.msk [vmem:[#allocation2 + $0x8] sm:$0xff] %vm1875, %v1860
          %1878 = vst.msk [vmem:[#allocation2 + $0x10] sm:$0xff] %vm1875, %v1861
          %1879 = vst.msk [vmem:[#allocation2 + $0x18] sm:$0xff] %vm1875, %v1862
          %1880 = vst.msk [vmem:[#allocation2 + $0x20] sm:$0xff] %vm1875, %v1863
          %1881 = vst.msk [vmem:[#allocation2 + $0x28] sm:$0xff] %vm1875, %v1864
          %1882 = vst.msk [vmem:[#allocation2 + $0x30] sm:$0xff] %vm1875, %v1865
          %1883 = vst.msk [vmem:[#allocation2 + $0x38] sm:$0xff] %vm1875, %v1866
          %1884 = vst.msk [vmem:[#allocation2 + $0x40] sm:$0xff] %vm1875, %v1867
          %1885 = vst.msk [vmem:[#allocation2 + $0x48] sm:$0xff] %vm1875, %v1868
          %1886 = vst.msk [vmem:[#allocation2 + $0x50] sm:$0xff] %vm1875, %v1869
          %1887 = vst.msk [vmem:[#allocation2 + $0x58] sm:$0xff] %vm1875, %v1870
          %1888 = vst.msk [vmem:[#allocation2 + $0x60] sm:$0xff] %vm1875, %v1871
          %1889 = vst.msk [vmem:[#allocation2 + $0x68] sm:$0xff] %vm1875, %v1872
          %1890 = vst.msk [vmem:[#allocation2 + $0x70] sm:$0xff] %vm1875, %v1873
          %1891 = vst.msk [vmem:[#allocation2 + $0x78] sm:$0xff] %vm1875, %v1874
          %p1892 = scmp.eq.s32.totalorder %s21, 0
          // Predicated region
          $region53: #{tpu_custom_call.1} parent=51 // pred_check
            %p1893 = pneg %p1892
          $region54: #{tpu_custom_call.1} parent=51 // pred_check_branch
            %1895 = sbr.rel (%p1893) target = $region56
          $region55: #{tpu_custom_call.1} parent=51 // pred_region
            %v1896 = vld [vmem:[#allocation2] sm:$0xff]
            %v1897 = vld [vmem:[#allocation2 + $0x8] sm:$0xff]
            %v1898 = vld [vmem:[#allocation2 + $0x10] sm:$0xff]
            %v1899 = vld [vmem:[#allocation2 + $0x18] sm:$0xff]
            %v1900 = vld [vmem:[#allocation2 + $0x20] sm:$0xff]
            %v1901 = vld [vmem:[#allocation2 + $0x28] sm:$0xff]
            %v1902 = vld [vmem:[#allocation2 + $0x30] sm:$0xff]
            %v1903 = vld [vmem:[#allocation2 + $0x38] sm:$0xff]
            %v1904 = vld [vmem:[#allocation2 + $0x40] sm:$0xff]
            %v1905 = vld [vmem:[#allocation2 + $0x48] sm:$0xff]
            %v1906 = vld [vmem:[#allocation2 + $0x50] sm:$0xff]
            %v1907 = vld [vmem:[#allocation2 + $0x58] sm:$0xff]
            %v1908 = vld [vmem:[#allocation2 + $0x60] sm:$0xff]
            %v1909 = vld [vmem:[#allocation2 + $0x68] sm:$0xff]
            %v1910 = vld [vmem:[#allocation2 + $0x70] sm:$0xff]
            %v1911 = vld [vmem:[#allocation2 + $0x78] sm:$0xff]
            %v1912 = vmul.f32 %v1896, 0.125
            %v1913 = vmul.f32 %v1897, 0.125
            %v1914 = vmul.f32 %v1898, 0.125
            %v1915 = vmul.f32 %v1899, 0.125
            %v1916 = vmul.f32 %v1900, 0.125
            %v1917 = vmul.f32 %v1901, 0.125
            %v1918 = vmul.f32 %v1902, 0.125
            %v1919 = vmul.f32 %v1903, 0.125
            %v1920 = vmul.f32 %v1904, 0.125
            %v1921 = vmul.f32 %v1905, 0.125
            %v1922 = vmul.f32 %v1906, 0.125
            %v1923 = vmul.f32 %v1907, 0.125
            %v1924 = vmul.f32 %v1908, 0.125
            %v1925 = vmul.f32 %v1909, 0.125
            %v1926 = vmul.f32 %v1910, 0.125
            %v1927 = vmul.f32 %v1911, 0.125
            %v1928 = vmul.f32 %v1912, %v1912
            %v1929 = vmul.f32 %v1913, %v1913
            %v1930 = vmul.f32 %v1914, %v1914
            %v1931 = vmul.f32 %v1915, %v1915
            %v1932 = vmul.f32 %v1916, %v1916
            %v1933 = vmul.f32 %v1917, %v1917
            %v1934 = vmul.f32 %v1918, %v1918
            %v1935 = vmul.f32 %v1919, %v1919
            %v1936 = vmul.f32 %v1920, %v1920
            %v1937 = vmul.f32 %v1921, %v1921
            %v1938 = vmul.f32 %v1922, %v1922
            %v1939 = vmul.f32 %v1923, %v1923
            %v1940 = vmul.f32 %v1924, %v1924
            %v1941 = vmul.f32 %v1925, %v1925
            %v1942 = vmul.f32 %v1926, %v1926
            %v1943 = vmul.f32 %v1927, %v1927
            %1960 = vrot.lane.b32.xlu0 %v1928, 1
            %v1961 = vpop.permute.xlu0 %1960
            %1962 = vrot.lane.b32.xlu0 %v1929, 1
            %v1963 = vpop.permute.xlu0 %1962
            %1964 = vrot.lane.b32.xlu0 %v1930, 1
            %v1965 = vpop.permute.xlu0 %1964
            %1966 = vrot.lane.b32.xlu0 %v1931, 1
            %v1967 = vpop.permute.xlu0 %1966
            %1968 = vrot.lane.b32.xlu0 %v1932, 1
            %v1969 = vpop.permute.xlu0 %1968
            %1970 = vrot.lane.b32.xlu0 %v1933, 1
            %v1971 = vpop.permute.xlu0 %1970
            %1972 = vrot.lane.b32.xlu0 %v1934, 1
            %v1973 = vpop.permute.xlu0 %1972
            %1974 = vrot.lane.b32.xlu0 %v1935, 1
            %v1975 = vpop.permute.xlu0 %1974
            %1976 = vrot.lane.b32.xlu0 %v1936, 1
            %v1977 = vpop.permute.xlu0 %1976
            %1978 = vrot.lane.b32.xlu0 %v1937, 1
            %v1979 = vpop.permute.xlu0 %1978
            %1980 = vrot.lane.b32.xlu0 %v1938, 1
            %v1981 = vpop.permute.xlu0 %1980
            %1982 = vrot.lane.b32.xlu0 %v1939, 1
            %v1983 = vpop.permute.xlu0 %1982
            %1984 = vrot.lane.b32.xlu0 %v1940, 1
            %v1985 = vpop.permute.xlu0 %1984
            %1986 = vrot.lane.b32.xlu0 %v1941, 1
            %v1987 = vpop.permute.xlu0 %1986
            %1988 = vrot.lane.b32.xlu0 %v1942, 1
            %v1989 = vpop.permute.xlu0 %1988
            %1990 = vrot.lane.b32.xlu0 %v1943, 1
            %v1991 = vpop.permute.xlu0 %1990
            %v2008 = vsub.f32 %v1912, %v1961
            %v2009 = vsub.f32 %v1913, %v1963
            %v2010 = vsub.f32 %v1914, %v1965
            %v2011 = vsub.f32 %v1915, %v1967
            %v2012 = vsub.f32 %v1916, %v1969
            %v2013 = vsub.f32 %v1917, %v1971
            %v2014 = vsub.f32 %v1918, %v1973
            %v2015 = vsub.f32 %v1919, %v1975
            %v2016 = vsub.f32 %v1920, %v1977
            %v2017 = vsub.f32 %v1921, %v1979
            %v2018 = vsub.f32 %v1922, %v1981
            %v2019 = vsub.f32 %v1923, %v1983
            %v2020 = vsub.f32 %v1924, %v1985
            %v2021 = vsub.f32 %v1925, %v1987
            %v2022 = vsub.f32 %v1926, %v1989
            %v2023 = vsub.f32 %v1927, %v1991
            %v2024 = vmax.f32 %v2008, 0.0
            %v2025 = vmax.f32 %v2009, 0.0
            %v2026 = vmax.f32 %v2010, 0.0
            %v2027 = vmax.f32 %v2011, 0.0
            %v2028 = vmax.f32 %v2012, 0.0
            %v2029 = vmax.f32 %v2013, 0.0
            %v2030 = vmax.f32 %v2014, 0.0
            %v2031 = vmax.f32 %v2015, 0.0
            %v2032 = vmax.f32 %v2016, 0.0
            %v2033 = vmax.f32 %v2017, 0.0
            %v2034 = vmax.f32 %v2018, 0.0
            %v2035 = vmax.f32 %v2019, 0.0
            %v2036 = vmax.f32 %v2020, 0.0
            %v2037 = vmax.f32 %v2021, 0.0
            %v2038 = vmax.f32 %v2022, 0.0
            %v2039 = vmax.f32 %v2023, 0.0
            %v2040 = vadd.f32 %v2024, 1e-05
            %v2041 = vadd.f32 %v2025, 1e-05
            %v2042 = vadd.f32 %v2026, 1e-05
            %v2043 = vadd.f32 %v2027, 1e-05
            %v2044 = vadd.f32 %v2028, 1e-05
            %v2045 = vadd.f32 %v2029, 1e-05
            %v2046 = vadd.f32 %v2030, 1e-05
            %v2047 = vadd.f32 %v2031, 1e-05
            %v2048 = vadd.f32 %v2032, 1e-05
            %v2049 = vadd.f32 %v2033, 1e-05
            %v2050 = vadd.f32 %v2034, 1e-05
            %v2051 = vadd.f32 %v2035, 1e-05
            %v2052 = vadd.f32 %v2036, 1e-05
            %v2053 = vadd.f32 %v2037, 1e-05
            %v2054 = vadd.f32 %v2038, 1e-05
            %v2055 = vadd.f32 %v2039, 1e-05
            %v2056 = vrsqrt.pop %v2040
            %v2057 = vmul.f32 %v2056, %v2040
            %v2058 = vmul.f32 %v2057, %v2056
            %v2059 = vmul.f32 0.5, %v2058
            %v2060 = vsub.f32 1.5, %v2059
            %v2061 = vmul.f32 %v2056, %v2060
            %vm2062 = vweird.f32 %v2040
            %vm2063 = vweird.f32 %v2056
            %vm2064 = vmor %vm2062, %vm2063
            %v2065 = vsel %vm2064, %v2056, %v2061
            %v2066 = vrsqrt.pop %v2041
            %v2067 = vmul.f32 %v2066, %v2041
            %v2068 = vmul.f32 %v2067, %v2066
            %v2069 = vmul.f32 0.5, %v2068
            %v2070 = vsub.f32 1.5, %v2069
            %v2071 = vmul.f32 %v2066, %v2070
            %vm2072 = vweird.f32 %v2041
            %vm2073 = vweird.f32 %v2066
            %vm2074 = vmor %vm2072, %vm2073
            %v2075 = vsel %vm2074, %v2066, %v2071
            %v2076 = vrsqrt.pop %v2042
            %v2077 = vmul.f32 %v2076, %v2042
            %v2078 = vmul.f32 %v2077, %v2076
            %v2079 = vmul.f32 0.5, %v2078
            %v2080 = vsub.f32 1.5, %v2079
            %v2081 = vmul.f32 %v2076, %v2080
            %vm2082 = vweird.f32 %v2042
            %vm2083 = vweird.f32 %v2076
            %vm2084 = vmor %vm2082, %vm2083
            %v2085 = vsel %vm2084, %v2076, %v2081
            %v2086 = vrsqrt.pop %v2043
            %v2087 = vmul.f32 %v2086, %v2043
            %v2088 = vmul.f32 %v2087, %v2086
            %v2089 = vmul.f32 0.5, %v2088
            %v2090 = vsub.f32 1.5, %v2089
            %v2091 = vmul.f32 %v2086, %v2090
            %vm2092 = vweird.f32 %v2043
            %vm2093 = vweird.f32 %v2086
            %vm2094 = vmor %vm2092, %vm2093
            %v2095 = vsel %vm2094, %v2086, %v2091
            %v2096 = vrsqrt.pop %v2044
            %v2097 = vmul.f32 %v2096, %v2044
            %v2098 = vmul.f32 %v2097, %v2096
            %v2099 = vmul.f32 0.5, %v2098
            %v2100 = vsub.f32 1.5, %v2099
            %v2101 = vmul.f32 %v2096, %v2100
            %vm2102 = vweird.f32 %v2044
            %vm2103 = vweird.f32 %v2096
            %vm2104 = vmor %vm2102, %vm2103
            %v2105 = vsel %vm2104, %v2096, %v2101
            %v2106 = vrsqrt.pop %v2045
            %v2107 = vmul.f32 %v2106, %v2045
            %v2108 = vmul.f32 %v2107, %v2106
            %v2109 = vmul.f32 0.5, %v2108
            %v2110 = vsub.f32 1.5, %v2109
            %v2111 = vmul.f32 %v2106, %v2110
            %vm2112 = vweird.f32 %v2045
            %vm2113 = vweird.f32 %v2106
            %vm2114 = vmor %vm2112, %vm2113
            %v2115 = vsel %vm2114, %v2106, %v2111
            %v2116 = vrsqrt.pop %v2046
            %v2117 = vmul.f32 %v2116, %v2046
            %v2118 = vmul.f32 %v2117, %v2116
            %v2119 = vmul.f32 0.5, %v2118
            %v2120 = vsub.f32 1.5, %v2119
            %v2121 = vmul.f32 %v2116, %v2120
            %vm2122 = vweird.f32 %v2046
            %vm2123 = vweird.f32 %v2116
            %vm2124 = vmor %vm2122, %vm2123
            %v2125 = vsel %vm2124, %v2116, %v2121
            %v2126 = vrsqrt.pop %v2047
            %v2127 = vmul.f32 %v2126, %v2047
            %v2128 = vmul.f32 %v2127, %v2126
            %v2129 = vmul.f32 0.5, %v2128
            %v2130 = vsub.f32 1.5, %v2129
            %v2131 = vmul.f32 %v2126, %v2130
            %vm2132 = vweird.f32 %v2047
            %vm2133 = vweird.f32 %v2126
            %vm2134 = vmor %vm2132, %vm2133
            %v2135 = vsel %vm2134, %v2126, %v2131
            %v2136 = vrsqrt.pop %v2048
            %v2137 = vmul.f32 %v2136, %v2048
            %v2138 = vmul.f32 %v2137, %v2136
            %v2139 = vmul.f32 0.5, %v2138
            %v2140 = vsub.f32 1.5, %v2139
            %v2141 = vmul.f32 %v2136, %v2140
            %vm2142 = vweird.f32 %v2048
            %vm2143 = vweird.f32 %v2136
            %vm2144 = vmor %vm2142, %vm2143
            %v2145 = vsel %vm2144, %v2136, %v2141
            %v2146 = vrsqrt.pop %v2049
            %v2147 = vmul.f32 %v2146, %v2049
            %v2148 = vmul.f32 %v2147, %v2146
            %v2149 = vmul.f32 0.5, %v2148
            %v2150 = vsub.f32 1.5, %v2149
            %v2151 = vmul.f32 %v2146, %v2150
            %vm2152 = vweird.f32 %v2049
            %vm2153 = vweird.f32 %v2146
            %vm2154 = vmor %vm2152, %vm2153
            %v2155 = vsel %vm2154, %v2146, %v2151
            %v2156 = vrsqrt.pop %v2050
            %v2157 = vmul.f32 %v2156, %v2050
            %v2158 = vmul.f32 %v2157, %v2156
            %v2159 = vmul.f32 0.5, %v2158
            %v2160 = vsub.f32 1.5, %v2159
            %v2161 = vmul.f32 %v2156, %v2160
            %vm2162 = vweird.f32 %v2050
            %vm2163 = vweird.f32 %v2156
            %vm2164 = vmor %vm2162, %vm2163
            %v2165 = vsel %vm2164, %v2156, %v2161
            %v2166 = vrsqrt.pop %v2051
            %v2167 = vmul.f32 %v2166, %v2051
            %v2168 = vmul.f32 %v2167, %v2166
            %v2169 = vmul.f32 0.5, %v2168
            %v2170 = vsub.f32 1.5, %v2169
            %v2171 = vmul.f32 %v2166, %v2170
            %vm2172 = vweird.f32 %v2051
            %vm2173 = vweird.f32 %v2166
            %vm2174 = vmor %vm2172, %vm2173
            %v2175 = vsel %vm2174, %v2166, %v2171
            %v2176 = vrsqrt.pop %v2052
            %v2177 = vmul.f32 %v2176, %v2052
            %v2178 = vmul.f32 %v2177, %v2176
            %v2179 = vmul.f32 0.5, %v2178
            %v2180 = vsub.f32 1.5, %v2179
            %v2181 = vmul.f32 %v2176, %v2180
            %vm2182 = vweird.f32 %v2052
            %vm2183 = vweird.f32 %v2176
            %vm2184 = vmor %vm2182, %vm2183
            %v2185 = vsel %vm2184, %v2176, %v2181
            %v2186 = vrsqrt.pop %v2053
            %v2187 = vmul.f32 %v2186, %v2053
            %v2188 = vmul.f32 %v2187, %v2186
            %v2189 = vmul.f32 0.5, %v2188
            %v2190 = vsub.f32 1.5, %v2189
            %v2191 = vmul.f32 %v2186, %v2190
            %vm2192 = vweird.f32 %v2053
            %vm2193 = vweird.f32 %v2186
            %vm2194 = vmor %vm2192, %vm2193
            %v2195 = vsel %vm2194, %v2186, %v2191
            %v2196 = vrsqrt.pop %v2054
            %v2197 = vmul.f32 %v2196, %v2054
            %v2198 = vmul.f32 %v2197, %v2196
            %v2199 = vmul.f32 0.5, %v2198
            %v2200 = vsub.f32 1.5, %v2199
            %v2201 = vmul.f32 %v2196, %v2200
            %vm2202 = vweird.f32 %v2054
            %vm2203 = vweird.f32 %v2196
            %vm2204 = vmor %vm2202, %vm2203
            %v2205 = vsel %vm2204, %v2196, %v2201
            %v2206 = vrsqrt.pop %v2055
            %v2207 = vmul.f32 %v2206, %v2055
            %v2208 = vmul.f32 %v2207, %v2206
            %v2209 = vmul.f32 0.5, %v2208
            %v2210 = vsub.f32 1.5, %v2209
            %v2211 = vmul.f32 %v2206, %v2210
            %vm2212 = vweird.f32 %v2055
            %vm2213 = vweird.f32 %v2206
            %vm2214 = vmor %vm2212, %vm2213
            %v2215 = vsel %vm2214, %v2206, %v2211
            %2232 = vrot.lane.b32.xlu0 %v2065, 127
            %v2233 = vpop.permute.xlu0 %2232
            %2234 = vrot.lane.b32.xlu0 %v2075, 127
            %v2235 = vpop.permute.xlu0 %2234
            %2236 = vrot.lane.b32.xlu0 %v2085, 127
            %v2237 = vpop.permute.xlu0 %2236
            %2238 = vrot.lane.b32.xlu0 %v2095, 127
            %v2239 = vpop.permute.xlu0 %2238
            %2240 = vrot.lane.b32.xlu0 %v2105, 127
            %v2241 = vpop.permute.xlu0 %2240
            %2242 = vrot.lane.b32.xlu0 %v2115, 127
            %v2243 = vpop.permute.xlu0 %2242
            %2244 = vrot.lane.b32.xlu0 %v2125, 127
            %v2245 = vpop.permute.xlu0 %2244
            %2246 = vrot.lane.b32.xlu0 %v2135, 127
            %v2247 = vpop.permute.xlu0 %2246
            %2248 = vrot.lane.b32.xlu0 %v2145, 127
            %v2249 = vpop.permute.xlu0 %2248
            %2250 = vrot.lane.b32.xlu0 %v2155, 127
            %v2251 = vpop.permute.xlu0 %2250
            %2252 = vrot.lane.b32.xlu0 %v2165, 127
            %v2253 = vpop.permute.xlu0 %2252
            %2254 = vrot.lane.b32.xlu0 %v2175, 127
            %v2255 = vpop.permute.xlu0 %2254
            %2256 = vrot.lane.b32.xlu0 %v2185, 127
            %v2257 = vpop.permute.xlu0 %2256
            %2258 = vrot.lane.b32.xlu0 %v2195, 127
            %v2259 = vpop.permute.xlu0 %2258
            %2260 = vrot.lane.b32.xlu0 %v2205, 127
            %v2261 = vpop.permute.xlu0 %2260
            %2262 = vrot.lane.b32.xlu0 %v2215, 127
            %v2263 = vpop.permute.xlu0 %2262
            %v2280 = vmul.f32 %v199, %v2233
            %v2281 = vmul.f32 %v200, %v2235
            %v2282 = vmul.f32 %v201, %v2237
            %v2283 = vmul.f32 %v202, %v2239
            %v2284 = vmul.f32 %v203, %v2241
            %v2285 = vmul.f32 %v204, %v2243
            %v2286 = vmul.f32 %v205, %v2245
            %v2287 = vmul.f32 %v206, %v2247
            %v2288 = vmul.f32 %v207, %v2249
            %v2289 = vmul.f32 %v208, %v2251
            %v2290 = vmul.f32 %v209, %v2253
            %v2291 = vmul.f32 %v210, %v2255
            %v2292 = vmul.f32 %v211, %v2257
            %v2293 = vmul.f32 %v212, %v2259
            %v2294 = vmul.f32 %v213, %v2261
            %v2295 = vmul.f32 %v214, %v2263
            %2312 = vrot.lane.b32.xlu0 %v2280, 2
            %v2313 = vpop.permute.xlu0 %2312
            %2314 = vrot.lane.b32.xlu0 %v2281, 2
            %v2315 = vpop.permute.xlu0 %2314
            %2316 = vrot.lane.b32.xlu0 %v2282, 2
            %v2317 = vpop.permute.xlu0 %2316
            %2318 = vrot.lane.b32.xlu0 %v2283, 2
            %v2319 = vpop.permute.xlu0 %2318
            %2320 = vrot.lane.b32.xlu0 %v2284, 2
            %v2321 = vpop.permute.xlu0 %2320
            %2322 = vrot.lane.b32.xlu0 %v2285, 2
            %v2323 = vpop.permute.xlu0 %2322
            %2324 = vrot.lane.b32.xlu0 %v2286, 2
            %v2325 = vpop.permute.xlu0 %2324
            %2326 = vrot.lane.b32.xlu0 %v2287, 2
            %v2327 = vpop.permute.xlu0 %2326
            %2328 = vrot.lane.b32.xlu0 %v2288, 2
            %v2329 = vpop.permute.xlu0 %2328
            %2330 = vrot.lane.b32.xlu0 %v2289, 2
            %v2331 = vpop.permute.xlu0 %2330
            %2332 = vrot.lane.b32.xlu0 %v2290, 2
            %v2333 = vpop.permute.xlu0 %2332
            %2334 = vrot.lane.b32.xlu0 %v2291, 2
            %v2335 = vpop.permute.xlu0 %2334
            %2336 = vrot.lane.b32.xlu0 %v2292, 2
            %v2337 = vpop.permute.xlu0 %2336
            %2338 = vrot.lane.b32.xlu0 %v2293, 2
            %v2339 = vpop.permute.xlu0 %2338
            %2340 = vrot.lane.b32.xlu0 %v2294, 2
            %v2341 = vpop.permute.xlu0 %2340
            %2342 = vrot.lane.b32.xlu0 %v2295, 2
            %v2343 = vpop.permute.xlu0 %2342
            %vm2360 = vcmask 56368
            %2361 = vst.msk [vmem:[#allocation2] sm:$0xff] %vm2360, %v2313
            %2362 = vst.msk [vmem:[#allocation2 + $0x8] sm:$0xff] %vm2360, %v2315
            %2363 = vst.msk [vmem:[#allocation2 + $0x10] sm:$0xff] %vm2360, %v2317
            %2364 = vst.msk [vmem:[#allocation2 + $0x18] sm:$0xff] %vm2360, %v2319
            %2365 = vst.msk [vmem:[#allocation2 + $0x20] sm:$0xff] %vm2360, %v2321
            %2366 = vst.msk [vmem:[#allocation2 + $0x28] sm:$0xff] %vm2360, %v2323
            %2367 = vst.msk [vmem:[#allocation2 + $0x30] sm:$0xff] %vm2360, %v2325
            %2368 = vst.msk [vmem:[#allocation2 + $0x38] sm:$0xff] %vm2360, %v2327
            %2369 = vst.msk [vmem:[#allocation2 + $0x40] sm:$0xff] %vm2360, %v2329
            %2370 = vst.msk [vmem:[#allocation2 + $0x48] sm:$0xff] %vm2360, %v2331
            %2371 = vst.msk [vmem:[#allocation2 + $0x50] sm:$0xff] %vm2360, %v2333
            %2372 = vst.msk [vmem:[#allocation2 + $0x58] sm:$0xff] %vm2360, %v2335
            %2373 = vst.msk [vmem:[#allocation2 + $0x60] sm:$0xff] %vm2360, %v2337
            %2374 = vst.msk [vmem:[#allocation2 + $0x68] sm:$0xff] %vm2360, %v2339
            %2375 = vst.msk [vmem:[#allocation2 + $0x70] sm:$0xff] %vm2360, %v2341
            %2376 = vst.msk [vmem:[#allocation2 + $0x78] sm:$0xff] %vm2360, %v2343
            %v2377 = vmul.f32 %v1912, %v2280
            %v2378 = vmul.f32 %v1913, %v2281
            %v2379 = vmul.f32 %v1914, %v2282
            %v2380 = vmul.f32 %v1915, %v2283
            %v2381 = vmul.f32 %v1916, %v2284
            %v2382 = vmul.f32 %v1917, %v2285
            %v2383 = vmul.f32 %v1918, %v2286
            %v2384 = vmul.f32 %v1919, %v2287
            %v2385 = vmul.f32 %v1920, %v2288
            %v2386 = vmul.f32 %v1921, %v2289
            %v2387 = vmul.f32 %v1922, %v2290
            %v2388 = vmul.f32 %v1923, %v2291
            %v2389 = vmul.f32 %v1924, %v2292
            %v2390 = vmul.f32 %v1925, %v2293
            %v2391 = vmul.f32 %v1926, %v2294
            %v2392 = vmul.f32 %v1927, %v2295
            %2409 = vrot.lane.b32.xlu0 %v2377, 1
            %v2410 = vpop.permute.xlu0 %2409
            %2411 = vrot.lane.b32.xlu0 %v2378, 1
            %v2412 = vpop.permute.xlu0 %2411
            %2413 = vrot.lane.b32.xlu0 %v2379, 1
            %v2414 = vpop.permute.xlu0 %2413
            %2415 = vrot.lane.b32.xlu0 %v2380, 1
            %v2416 = vpop.permute.xlu0 %2415
            %2417 = vrot.lane.b32.xlu0 %v2381, 1
            %v2418 = vpop.permute.xlu0 %2417
            %2419 = vrot.lane.b32.xlu0 %v2382, 1
            %v2420 = vpop.permute.xlu0 %2419
            %2421 = vrot.lane.b32.xlu0 %v2383, 1
            %v2422 = vpop.permute.xlu0 %2421
            %2423 = vrot.lane.b32.xlu0 %v2384, 1
            %v2424 = vpop.permute.xlu0 %2423
            %2425 = vrot.lane.b32.xlu0 %v2385, 1
            %v2426 = vpop.permute.xlu0 %2425
            %2427 = vrot.lane.b32.xlu0 %v2386, 1
            %v2428 = vpop.permute.xlu0 %2427
            %2429 = vrot.lane.b32.xlu0 %v2387, 1
            %v2430 = vpop.permute.xlu0 %2429
            %2431 = vrot.lane.b32.xlu0 %v2388, 1
            %v2432 = vpop.permute.xlu0 %2431
            %2433 = vrot.lane.b32.xlu0 %v2389, 1
            %v2434 = vpop.permute.xlu0 %2433
            %2435 = vrot.lane.b32.xlu0 %v2390, 1
            %v2436 = vpop.permute.xlu0 %2435
            %2437 = vrot.lane.b32.xlu0 %v2391, 1
            %v2438 = vpop.permute.xlu0 %2437
            %2439 = vrot.lane.b32.xlu0 %v2392, 1
            %v2440 = vpop.permute.xlu0 %2439
            %v2457 = vsub.f32 %v199, %v2410
            %v2458 = vsub.f32 %v200, %v2412
            %v2459 = vsub.f32 %v201, %v2414
            %v2460 = vsub.f32 %v202, %v2416
            %v2461 = vsub.f32 %v203, %v2418
            %v2462 = vsub.f32 %v204, %v2420
            %v2463 = vsub.f32 %v205, %v2422
            %v2464 = vsub.f32 %v206, %v2424
            %v2465 = vsub.f32 %v207, %v2426
            %v2466 = vsub.f32 %v208, %v2428
            %v2467 = vsub.f32 %v209, %v2430
            %v2468 = vsub.f32 %v210, %v2432
            %v2469 = vsub.f32 %v211, %v2434
            %v2470 = vsub.f32 %v212, %v2436
            %v2471 = vsub.f32 %v213, %v2438
            %v2472 = vsub.f32 %v214, %v2440
            %2489 = vrot.lane.b32.xlu0 %v2457, 2
            %v2490 = vpop.permute.xlu0 %2489
            %2491 = vrot.lane.b32.xlu0 %v2458, 2
            %v2492 = vpop.permute.xlu0 %2491
            %2493 = vrot.lane.b32.xlu0 %v2459, 2
            %v2494 = vpop.permute.xlu0 %2493
            %2495 = vrot.lane.b32.xlu0 %v2460, 2
            %v2496 = vpop.permute.xlu0 %2495
            %2497 = vrot.lane.b32.xlu0 %v2461, 2
            %v2498 = vpop.permute.xlu0 %2497
            %2499 = vrot.lane.b32.xlu0 %v2462, 2
            %v2500 = vpop.permute.xlu0 %2499
            %2501 = vrot.lane.b32.xlu0 %v2463, 2
            %v2502 = vpop.permute.xlu0 %2501
            %2503 = vrot.lane.b32.xlu0 %v2464, 2
            %v2504 = vpop.permute.xlu0 %2503
            %2505 = vrot.lane.b32.xlu0 %v2465, 2
            %v2506 = vpop.permute.xlu0 %2505
            %2507 = vrot.lane.b32.xlu0 %v2466, 2
            %v2508 = vpop.permute.xlu0 %2507
            %2509 = vrot.lane.b32.xlu0 %v2467, 2
            %v2510 = vpop.permute.xlu0 %2509
            %2511 = vrot.lane.b32.xlu0 %v2468, 2
            %v2512 = vpop.permute.xlu0 %2511
            %2513 = vrot.lane.b32.xlu0 %v2469, 2
            %v2514 = vpop.permute.xlu0 %2513
            %2515 = vrot.lane.b32.xlu0 %v2470, 2
            %v2516 = vpop.permute.xlu0 %2515
            %2517 = vrot.lane.b32.xlu0 %v2471, 2
            %v2518 = vpop.permute.xlu0 %2517
            %2519 = vrot.lane.b32.xlu0 %v2472, 2
            %v2520 = vpop.permute.xlu0 %2519
            %vm2537 = vcmask 64568
            %2538 = vst.msk [vmem:[#allocation2] sm:$0xff] %vm2537, %v2490
            %2539 = vst.msk [vmem:[#allocation2 + $0x8] sm:$0xff] %vm2537, %v2492
            %2540 = vst.msk [vmem:[#allocation2 + $0x10] sm:$0xff] %vm2537, %v2494
            %2541 = vst.msk [vmem:[#allocation2 + $0x18] sm:$0xff] %vm2537, %v2496
            %2542 = vst.msk [vmem:[#allocation2 + $0x20] sm:$0xff] %vm2537, %v2498
            %2543 = vst.msk [vmem:[#allocation2 + $0x28] sm:$0xff] %vm2537, %v2500
            %2544 = vst.msk [vmem:[#allocation2 + $0x30] sm:$0xff] %vm2537, %v2502
            %2545 = vst.msk [vmem:[#allocation2 + $0x38] sm:$0xff] %vm2537, %v2504
            %2546 = vst.msk [vmem:[#allocation2 + $0x40] sm:$0xff] %vm2537, %v2506
            %2547 = vst.msk [vmem:[#allocation2 + $0x48] sm:$0xff] %vm2537, %v2508
            %2548 = vst.msk [vmem:[#allocation2 + $0x50] sm:$0xff] %vm2537, %v2510
            %2549 = vst.msk [vmem:[#allocation2 + $0x58] sm:$0xff] %vm2537, %v2512
            %2550 = vst.msk [vmem:[#allocation2 + $0x60] sm:$0xff] %vm2537, %v2514
            %2551 = vst.msk [vmem:[#allocation2 + $0x68] sm:$0xff] %vm2537, %v2516
            %2552 = vst.msk [vmem:[#allocation2 + $0x70] sm:$0xff] %vm2537, %v2518
            %2553 = vst.msk [vmem:[#allocation2 + $0x78] sm:$0xff] %vm2537, %v2520
          $region56: #{tpu_custom_call.1} parent=51 // pred_fallthru
            _
        $region52: #{tpu_custom_call.1} parent=35 // pred_fallthru
          _
        %p2554 = scmp.eq.s32.totalorder %s20, 2
        // Predicated region
        $region57: #{tpu_custom_call.1} parent=35 // pred_check
          %p2555 = pneg %p2554
        $region58: #{tpu_custom_call.1} parent=35 // pred_check_branch
          %2557 = sbr.rel (%p2555) target = $region60
        $region59: #{tpu_custom_call.1} parent=35 // pred_region
          %v2558 = vld [vmem:[#allocation2] sm:$0xff]
          %v2559 = vld [vmem:[#allocation2 + $0x8] sm:$0xff]
          %v2560 = vld [vmem:[#allocation2 + $0x10] sm:$0xff]
          %v2561 = vld [vmem:[#allocation2 + $0x18] sm:$0xff]
          %v2562 = vld [vmem:[#allocation2 + $0x20] sm:$0xff]
          %v2563 = vld [vmem:[#allocation2 + $0x28] sm:$0xff]
          %v2564 = vld [vmem:[#allocation2 + $0x30] sm:$0xff]
          %v2565 = vld [vmem:[#allocation2 + $0x38] sm:$0xff]
          %v2566 = vld [vmem:[#allocation2 + $0x40] sm:$0xff]
          %v2567 = vld [vmem:[#allocation2 + $0x48] sm:$0xff]
          %v2568 = vld [vmem:[#allocation2 + $0x50] sm:$0xff]
          %v2569 = vld [vmem:[#allocation2 + $0x58] sm:$0xff]
          %v2570 = vld [vmem:[#allocation2 + $0x60] sm:$0xff]
          %v2571 = vld [vmem:[#allocation2 + $0x68] sm:$0xff]
          %v2572 = vld [vmem:[#allocation2 + $0x70] sm:$0xff]
          %v2573 = vld [vmem:[#allocation2 + $0x78] sm:$0xff]
          %2575 = vset.pattern.permute.xlu0 2
          %2576 = vperm.xlu0 %2575, %v2558
          %v2577 = vpop.permute.xlu0 %2576
          %2580 = vset.pattern.permute.xlu0 2
          %2581 = vperm.xlu0 %2580, %v2559
          %v2582 = vpop.permute.xlu0 %2581
          %2585 = vset.pattern.permute.xlu0 2
          %2586 = vperm.xlu0 %2585, %v2560
          %v2587 = vpop.permute.xlu0 %2586
          %2590 = vset.pattern.permute.xlu0 2
          %2591 = vperm.xlu0 %2590, %v2561
          %v2592 = vpop.permute.xlu0 %2591
          %2595 = vset.pattern.permute.xlu0 2
          %2596 = vperm.xlu0 %2595, %v2562
          %v2597 = vpop.permute.xlu0 %2596
          %2600 = vset.pattern.permute.xlu0 2
          %2601 = vperm.xlu0 %2600, %v2563
          %v2602 = vpop.permute.xlu0 %2601
          %2605 = vset.pattern.permute.xlu0 2
          %2606 = vperm.xlu0 %2605, %v2564
          %v2607 = vpop.permute.xlu0 %2606
          %2610 = vset.pattern.permute.xlu0 2
          %2611 = vperm.xlu0 %2610, %v2565
          %v2612 = vpop.permute.xlu0 %2611
          %2615 = vset.pattern.permute.xlu0 2
          %2616 = vperm.xlu0 %2615, %v2566
          %v2617 = vpop.permute.xlu0 %2616
          %2620 = vset.pattern.permute.xlu0 2
          %2621 = vperm.xlu0 %2620, %v2567
          %v2622 = vpop.permute.xlu0 %2621
          %2625 = vset.pattern.permute.xlu0 2
          %2626 = vperm.xlu0 %2625, %v2568
          %v2627 = vpop.permute.xlu0 %2626
          %2630 = vset.pattern.permute.xlu0 2
          %2631 = vperm.xlu0 %2630, %v2569
          %v2632 = vpop.permute.xlu0 %2631
          %2635 = vset.pattern.permute.xlu0 2
          %2636 = vperm.xlu0 %2635, %v2570
          %v2637 = vpop.permute.xlu0 %2636
          %2640 = vset.pattern.permute.xlu0 2
          %2641 = vperm.xlu0 %2640, %v2571
          %v2642 = vpop.permute.xlu0 %2641
          %2645 = vset.pattern.permute.xlu0 2
          %2646 = vperm.xlu0 %2645, %v2572
          %v2647 = vpop.permute.xlu0 %2646
          %2650 = vset.pattern.permute.xlu0 2
          %2651 = vperm.xlu0 %2650, %v2573
          %v2652 = vpop.permute.xlu0 %2651
          %v2654 = vmul.f32 %v438, %v2577
          %v2655 = vmul.f32 %v439, %v2582
          %v2656 = vmul.f32 %v440, %v2587
          %v2657 = vmul.f32 %v441, %v2592
          %v2658 = vmul.f32 %v442, %v2597
          %v2659 = vmul.f32 %v443, %v2602
          %v2660 = vmul.f32 %v444, %v2607
          %v2661 = vmul.f32 %v445, %v2612
          %v2662 = vmul.f32 %v446, %v2617
          %v2663 = vmul.f32 %v447, %v2622
          %v2664 = vmul.f32 %v448, %v2627
          %v2665 = vmul.f32 %v449, %v2632
          %v2666 = vmul.f32 %v450, %v2637
          %v2667 = vmul.f32 %v451, %v2642
          %v2668 = vmul.f32 %v452, %v2647
          %v2669 = vmul.f32 %v453, %v2652
          %2670 = vset.pattern.permute.xlu0 3
          %2671 = vperm.xlu0 %2670, %v2558
          %v2672 = vpop.permute.xlu0 %2671
          %2674 = vset.pattern.permute.xlu0 3
          %2675 = vperm.xlu0 %2674, %v2559
          %v2676 = vpop.permute.xlu0 %2675
          %2678 = vset.pattern.permute.xlu0 3
          %2679 = vperm.xlu0 %2678, %v2560
          %v2680 = vpop.permute.xlu0 %2679
          %2682 = vset.pattern.permute.xlu0 3
          %2683 = vperm.xlu0 %2682, %v2561
          %v2684 = vpop.permute.xlu0 %2683
          %2686 = vset.pattern.permute.xlu0 3
          %2687 = vperm.xlu0 %2686, %v2562
          %v2688 = vpop.permute.xlu0 %2687
          %2690 = vset.pattern.permute.xlu0 3
          %2691 = vperm.xlu0 %2690, %v2563
          %v2692 = vpop.permute.xlu0 %2691
          %2694 = vset.pattern.permute.xlu0 3
          %2695 = vperm.xlu0 %2694, %v2564
          %v2696 = vpop.permute.xlu0 %2695
          %2698 = vset.pattern.permute.xlu0 3
          %2699 = vperm.xlu0 %2698, %v2565
          %v2700 = vpop.permute.xlu0 %2699
          %2702 = vset.pattern.permute.xlu0 3
          %2703 = vperm.xlu0 %2702, %v2566
          %v2704 = vpop.permute.xlu0 %2703
          %2706 = vset.pattern.permute.xlu0 3
          %2707 = vperm.xlu0 %2706, %v2567
          %v2708 = vpop.permute.xlu0 %2707
          %2710 = vset.pattern.permute.xlu0 3
          %2711 = vperm.xlu0 %2710, %v2568
          %v2712 = vpop.permute.xlu0 %2711
          %2714 = vset.pattern.permute.xlu0 3
          %2715 = vperm.xlu0 %2714, %v2569
          %v2716 = vpop.permute.xlu0 %2715
          %2718 = vset.pattern.permute.xlu0 3
          %2719 = vperm.xlu0 %2718, %v2570
          %v2720 = vpop.permute.xlu0 %2719
          %2722 = vset.pattern.permute.xlu0 3
          %2723 = vperm.xlu0 %2722, %v2571
          %v2724 = vpop.permute.xlu0 %2723
          %2726 = vset.pattern.permute.xlu0 3
          %2727 = vperm.xlu0 %2726, %v2572
          %v2728 = vpop.permute.xlu0 %2727
          %2730 = vset.pattern.permute.xlu0 3
          %2731 = vperm.xlu0 %2730, %v2573
          %v2732 = vpop.permute.xlu0 %2731
          %v2734 = vadd.f32 %v2654, %v2672
          %v2735 = vadd.f32 %v2655, %v2676
          %v2736 = vadd.f32 %v2656, %v2680
          %v2737 = vadd.f32 %v2657, %v2684
          %v2738 = vadd.f32 %v2658, %v2688
          %v2739 = vadd.f32 %v2659, %v2692
          %v2740 = vadd.f32 %v2660, %v2696
          %v2741 = vadd.f32 %v2661, %v2700
          %v2742 = vadd.f32 %v2662, %v2704
          %v2743 = vadd.f32 %v2663, %v2708
          %v2744 = vadd.f32 %v2664, %v2712
          %v2745 = vadd.f32 %v2665, %v2716
          %v2746 = vadd.f32 %v2666, %v2720
          %v2747 = vadd.f32 %v2667, %v2724
          %v2748 = vadd.f32 %v2668, %v2728
          %v2749 = vadd.f32 %v2669, %v2732
          %v2750 = vpack.c.bf16 %v2735, %v2734
          %v2751 = vpack.c.bf16 %v2737, %v2736
          %v2752 = vpack.c.bf16 %v2739, %v2738
          %v2753 = vpack.c.bf16 %v2741, %v2740
          %v2754 = vpack.c.bf16 %v2743, %v2742
          %v2755 = vpack.c.bf16 %v2745, %v2744
          %v2756 = vpack.c.bf16 %v2747, %v2746
          %v2757 = vpack.c.bf16 %v2749, %v2748
          %v2758 = vld [vmem:[%s2] sm:$0xf]
          %v2759 = vld [vmem:[%s2 + $0x4] sm:$0xf]
          %v2760 = vld [vmem:[%s2 + $0x8] sm:$0xf]
          %v2761 = vld [vmem:[%s2 + $0xc] sm:$0xf]
          %v2762 = vld [vmem:[%s2 + $0x10] sm:$0xf]
          %v2763 = vld [vmem:[%s2 + $0x14] sm:$0xf]
          %v2764 = vld [vmem:[%s2 + $0x18] sm:$0xf]
          %v2765 = vld [vmem:[%s2 + $0x1c] sm:$0xf]
          %v2766 = vld [vmem:[%s2 + $0x20] sm:$0xf]
          %v2767 = vld [vmem:[%s2 + $0x24] sm:$0xf]
          %v2768 = vld [vmem:[%s2 + $0x28] sm:$0xf]
          %v2769 = vld [vmem:[%s2 + $0x2c] sm:$0xf]
          %v2770 = vld [vmem:[%s2 + $0x30] sm:$0xf]
          %v2771 = vld [vmem:[%s2 + $0x34] sm:$0xf]
          %v2772 = vld [vmem:[%s2 + $0x38] sm:$0xf]
          %v2773 = vld [vmem:[%s2 + $0x3c] sm:$0xf]
          %2774 = vset.pattern.permute.xlu0 3
          %2775 = vperm.xlu0 %2774, %v199
          %v2776 = vpop.permute.xlu0 %2775
          %2778 = vset.pattern.permute.xlu0 3
          %2779 = vperm.xlu0 %2778, %v200
          %v2780 = vpop.permute.xlu0 %2779
          %2782 = vset.pattern.permute.xlu0 3
          %2783 = vperm.xlu0 %2782, %v201
          %v2784 = vpop.permute.xlu0 %2783
          %2786 = vset.pattern.permute.xlu0 3
          %2787 = vperm.xlu0 %2786, %v202
          %v2788 = vpop.permute.xlu0 %2787
          %2790 = vset.pattern.permute.xlu0 3
          %2791 = vperm.xlu0 %2790, %v203
          %v2792 = vpop.permute.xlu0 %2791
          %2794 = vset.pattern.permute.xlu0 3
          %2795 = vperm.xlu0 %2794, %v204
          %v2796 = vpop.permute.xlu0 %2795
          %2798 = vset.pattern.permute.xlu0 3
          %2799 = vperm.xlu0 %2798, %v205
          %v2800 = vpop.permute.xlu0 %2799
          %2802 = vset.pattern.permute.xlu0 3
          %2803 = vperm.xlu0 %2802, %v206
          %v2804 = vpop.permute.xlu0 %2803
          %2806 = vset.pattern.permute.xlu0 3
          %2807 = vperm.xlu0 %2806, %v207
          %v2808 = vpop.permute.xlu0 %2807
          %2810 = vset.pattern.permute.xlu0 3
          %2811 = vperm.xlu0 %2810, %v208
          %v2812 = vpop.permute.xlu0 %2811
          %2814 = vset.pattern.permute.xlu0 3
          %2815 = vperm.xlu0 %2814, %v209
          %v2816 = vpop.permute.xlu0 %2815
          %2818 = vset.pattern.permute.xlu0 3
          %2819 = vperm.xlu0 %2818, %v210
          %v2820 = vpop.permute.xlu0 %2819
          %2822 = vset.pattern.permute.xlu0 3
          %2823 = vperm.xlu0 %2822, %v211
          %v2824 = vpop.permute.xlu0 %2823
          %2826 = vset.pattern.permute.xlu0 3
          %2827 = vperm.xlu0 %2826, %v212
          %v2828 = vpop.permute.xlu0 %2827
          %2830 = vset.pattern.permute.xlu0 3
          %2831 = vperm.xlu0 %2830, %v213
          %v2832 = vpop.permute.xlu0 %2831
          %2834 = vset.pattern.permute.xlu0 3
          %2835 = vperm.xlu0 %2834, %v214
          %v2836 = vpop.permute.xlu0 %2835
          %v2854 = vunpack.c.l.b16 %v2758
          %v2855 = vunpack.c.l.b16 %v2759
          %v2856 = vunpack.c.l.b16 %v2760
          %v2857 = vunpack.c.l.b16 %v2761
          %v2858 = vunpack.c.l.b16 %v2762
          %v2859 = vunpack.c.l.b16 %v2763
          %v2860 = vunpack.c.l.b16 %v2764
          %v2861 = vunpack.c.l.b16 %v2765
          %v2862 = vunpack.c.l.b16 %v2766
          %v2863 = vunpack.c.l.b16 %v2767
          %v2864 = vunpack.c.l.b16 %v2768
          %v2865 = vunpack.c.l.b16 %v2769
          %v2866 = vunpack.c.l.b16 %v2770
          %v2867 = vunpack.c.l.b16 %v2771
          %v2868 = vunpack.c.l.b16 %v2772
          %v2869 = vunpack.c.l.b16 %v2773
          %v2870 = vpack.c.b16 %v2855, %v2854
          %v2871 = vpack.c.b16 %v2857, %v2856
          %v2872 = vpack.c.b16 %v2859, %v2858
          %v2873 = vpack.c.b16 %v2861, %v2860
          %v2874 = vpack.c.b16 %v2863, %v2862
          %v2875 = vpack.c.b16 %v2865, %v2864
          %v2876 = vpack.c.b16 %v2867, %v2866
          %v2877 = vpack.c.b16 %v2869, %v2868
          %2886 = vmatpush.bf16.msra.mxu0 %v2757
          %2887 = vmatpush.bf16.msra.mxu0 %v2756
          %2888 = vmatpush.bf16.msra.mxu0 %v2755
          %2889 = vmatpush.bf16.msra.mxu0 %v2754
          %2890 = vmatpush.bf16.msra.mxu0 %v2753
          %2891 = vmatpush.bf16.msra.mxu0 %v2752
          %2892 = vmatpush.bf16.msra.mxu0 %v2751
          %2893 = vmatpush.bf16.msra.mxu0 %v2750
          %2894 = vmatmul.bf16.gmra.mxu0 %v2870
          %v2895 = vpop.f32.mrf.mxu0
          %v2896 = vadd.f32 %v2776, %v2895
          %v2897 = vpop.f32.mrf.mxu0
          %v2898 = vadd.f32 %v2780, %v2897
          %2899 = vmatmul.bf16.gmra.mxu0 %v2871
          %v2900 = vpop.f32.mrf.mxu0
          %v2901 = vadd.f32 %v2784, %v2900
          %v2902 = vpop.f32.mrf.mxu0
          %v2903 = vadd.f32 %v2788, %v2902
          %2904 = vmatmul.bf16.gmra.mxu0 %v2872
          %v2905 = vpop.f32.mrf.mxu0
          %v2906 = vadd.f32 %v2792, %v2905
          %v2907 = vpop.f32.mrf.mxu0
          %v2908 = vadd.f32 %v2796, %v2907
          %2909 = vmatmul.bf16.gmra.mxu0 %v2873
          %v2910 = vpop.f32.mrf.mxu0
          %v2911 = vadd.f32 %v2800, %v2910
          %v2912 = vpop.f32.mrf.mxu0
          %v2913 = vadd.f32 %v2804, %v2912
          %2914 = vmatmul.bf16.gmra.mxu0 %v2874
          %v2915 = vpop.f32.mrf.mxu0
          %v2916 = vadd.f32 %v2808, %v2915
          %v2917 = vpop.f32.mrf.mxu0
          %v2918 = vadd.f32 %v2812, %v2917
          %2919 = vmatmul.bf16.gmra.mxu0 %v2875
          %v2920 = vpop.f32.mrf.mxu0
          %v2921 = vadd.f32 %v2816, %v2920
          %v2922 = vpop.f32.mrf.mxu0
          %v2923 = vadd.f32 %v2820, %v2922
          %2924 = vmatmul.bf16.gmra.mxu0 %v2876
          %v2925 = vpop.f32.mrf.mxu0
          %v2926 = vadd.f32 %v2824, %v2925
          %v2927 = vpop.f32.mrf.mxu0
          %v2928 = vadd.f32 %v2828, %v2927
          %2929 = vmatmul.bf16.gmra.mxu0 %v2877
          %v2930 = vpop.f32.mrf.mxu0
          %v2931 = vadd.f32 %v2832, %v2930
          %v2932 = vpop.f32.mrf.mxu0
          %v2933 = vadd.f32 %v2836, %v2932
          %2934 = vdwg.mxu0
          %v2935 = vmax.f32 %v2896, 0.0
          %v2936 = vmax.f32 %v2898, 0.0
          %v2937 = vmax.f32 %v2901, 0.0
          %v2938 = vmax.f32 %v2903, 0.0
          %v2939 = vmax.f32 %v2906, 0.0
          %v2940 = vmax.f32 %v2908, 0.0
          %v2941 = vmax.f32 %v2911, 0.0
          %v2942 = vmax.f32 %v2913, 0.0
          %v2943 = vmax.f32 %v2916, 0.0
          %v2944 = vmax.f32 %v2918, 0.0
          %v2945 = vmax.f32 %v2921, 0.0
          %v2946 = vmax.f32 %v2923, 0.0
          %v2947 = vmax.f32 %v2926, 0.0
          %v2948 = vmax.f32 %v2928, 0.0
          %v2949 = vmax.f32 %v2931, 0.0
          %v2950 = vmax.f32 %v2933, 0.0
          %2951 = vset.pattern.permute.xlu0 6
          %2952 = vperm.xlu0 %2951, %v2558
          %v2953 = vpop.permute.xlu0 %2952
          %2955 = vset.pattern.permute.xlu0 6
          %2956 = vperm.xlu0 %2955, %v2559
          %v2957 = vpop.permute.xlu0 %2956
          %2959 = vset.pattern.permute.xlu0 6
          %2960 = vperm.xlu0 %2959, %v2560
          %v2961 = vpop.permute.xlu0 %2960
          %2963 = vset.pattern.permute.xlu0 6
          %2964 = vperm.xlu0 %2963, %v2561
          %v2965 = vpop.permute.xlu0 %2964
          %2967 = vset.pattern.permute.xlu0 6
          %2968 = vperm.xlu0 %2967, %v2562
          %v2969 = vpop.permute.xlu0 %2968
          %2971 = vset.pattern.permute.xlu0 6
          %2972 = vperm.xlu0 %2971, %v2563
          %v2973 = vpop.permute.xlu0 %2972
          %2975 = vset.pattern.permute.xlu0 6
          %2976 = vperm.xlu0 %2975, %v2564
          %v2977 = vpop.permute.xlu0 %2976
          %2979 = vset.pattern.permute.xlu0 6
          %2980 = vperm.xlu0 %2979, %v2565
          %v2981 = vpop.permute.xlu0 %2980
          %2983 = vset.pattern.permute.xlu0 6
          %2984 = vperm.xlu0 %2983, %v2566
          %v2985 = vpop.permute.xlu0 %2984
          %2987 = vset.pattern.permute.xlu0 6
          %2988 = vperm.xlu0 %2987, %v2567
          %v2989 = vpop.permute.xlu0 %2988
          %2991 = vset.pattern.permute.xlu0 6
          %2992 = vperm.xlu0 %2991, %v2568
          %v2993 = vpop.permute.xlu0 %2992
          %2995 = vset.pattern.permute.xlu0 6
          %2996 = vperm.xlu0 %2995, %v2569
          %v2997 = vpop.permute.xlu0 %2996
          %2999 = vset.pattern.permute.xlu0 6
          %3000 = vperm.xlu0 %2999, %v2570
          %v3001 = vpop.permute.xlu0 %3000
          %3003 = vset.pattern.permute.xlu0 6
          %3004 = vperm.xlu0 %3003, %v2571
          %v3005 = vpop.permute.xlu0 %3004
          %3007 = vset.pattern.permute.xlu0 6
          %3008 = vperm.xlu0 %3007, %v2572
          %v3009 = vpop.permute.xlu0 %3008
          %3011 = vset.pattern.permute.xlu0 6
          %3012 = vperm.xlu0 %3011, %v2573
          %v3013 = vpop.permute.xlu0 %3012
          %v3015 = vmul.f32 %v2935, %v2953
          %v3016 = vmul.f32 %v2936, %v2957
          %v3017 = vmul.f32 %v2937, %v2961
          %v3018 = vmul.f32 %v2938, %v2965
          %v3019 = vmul.f32 %v2939, %v2969
          %v3020 = vmul.f32 %v2940, %v2973
          %v3021 = vmul.f32 %v2941, %v2977
          %v3022 = vmul.f32 %v2942, %v2981
          %v3023 = vmul.f32 %v2943, %v2985
          %v3024 = vmul.f32 %v2944, %v2989
          %v3025 = vmul.f32 %v2945, %v2993
          %v3026 = vmul.f32 %v2946, %v2997
          %v3027 = vmul.f32 %v2947, %v3001
          %v3028 = vmul.f32 %v2948, %v3005
          %v3029 = vmul.f32 %v2949, %v3009
          %v3030 = vmul.f32 %v2950, %v3013
          %3031 = vset.pattern.permute.xlu0 7
          %3032 = vperm.xlu0 %3031, %v2558
          %v3033 = vpop.permute.xlu0 %3032
          %3035 = vset.pattern.permute.xlu0 7
          %3036 = vperm.xlu0 %3035, %v2559
          %v3037 = vpop.permute.xlu0 %3036
          %3039 = vset.pattern.permute.xlu0 7
          %3040 = vperm.xlu0 %3039, %v2560
          %v3041 = vpop.permute.xlu0 %3040
          %3043 = vset.pattern.permute.xlu0 7
          %3044 = vperm.xlu0 %3043, %v2561
          %v3045 = vpop.permute.xlu0 %3044
          %3047 = vset.pattern.permute.xlu0 7
          %3048 = vperm.xlu0 %3047, %v2562
          %v3049 = vpop.permute.xlu0 %3048
          %3051 = vset.pattern.permute.xlu0 7
          %3052 = vperm.xlu0 %3051, %v2563
          %v3053 = vpop.permute.xlu0 %3052
          %3055 = vset.pattern.permute.xlu0 7
          %3056 = vperm.xlu0 %3055, %v2564
          %v3057 = vpop.permute.xlu0 %3056
          %3059 = vset.pattern.permute.xlu0 7
          %3060 = vperm.xlu0 %3059, %v2565
          %v3061 = vpop.permute.xlu0 %3060
          %3063 = vset.pattern.permute.xlu0 7
          %3064 = vperm.xlu0 %3063, %v2566
          %v3065 = vpop.permute.xlu0 %3064
          %3067 = vset.pattern.permute.xlu0 7
          %3068 = vperm.xlu0 %3067, %v2567
          %v3069 = vpop.permute.xlu0 %3068
          %3071 = vset.pattern.permute.xlu0 7
          %3072 = vperm.xlu0 %3071, %v2568
          %v3073 = vpop.permute.xlu0 %3072
          %3075 = vset.pattern.permute.xlu0 7
          %3076 = vperm.xlu0 %3075, %v2569
          %v3077 = vpop.permute.xlu0 %3076
          %3079 = vset.pattern.permute.xlu0 7
          %3080 = vperm.xlu0 %3079, %v2570
          %v3081 = vpop.permute.xlu0 %3080
          %3083 = vset.pattern.permute.xlu0 7
          %3084 = vperm.xlu0 %3083, %v2571
          %v3085 = vpop.permute.xlu0 %3084
          %3087 = vset.pattern.permute.xlu0 7
          %3088 = vperm.xlu0 %3087, %v2572
          %v3089 = vpop.permute.xlu0 %3088
          %3091 = vset.pattern.permute.xlu0 7
          %3092 = vperm.xlu0 %3091, %v2573
          %v3093 = vpop.permute.xlu0 %3092
          %v3095 = vadd.f32 %v3015, %v3033
          %v3096 = vadd.f32 %v3016, %v3037
          %v3097 = vadd.f32 %v3017, %v3041
          %v3098 = vadd.f32 %v3018, %v3045
          %v3099 = vadd.f32 %v3019, %v3049
          %v3100 = vadd.f32 %v3020, %v3053
          %v3101 = vadd.f32 %v3021, %v3057
          %v3102 = vadd.f32 %v3022, %v3061
          %v3103 = vadd.f32 %v3023, %v3065
          %v3104 = vadd.f32 %v3024, %v3069
          %v3105 = vadd.f32 %v3025, %v3073
          %v3106 = vadd.f32 %v3026, %v3077
          %v3107 = vadd.f32 %v3027, %v3081
          %v3108 = vadd.f32 %v3028, %v3085
          %v3109 = vadd.f32 %v3029, %v3089
          %v3110 = vadd.f32 %v3030, %v3093
          %3111 = vset.pattern.permute.xlu0 6
          %3112 = vperm.xlu0 %3111, %v199
          %v3113 = vpop.permute.xlu0 %3112
          %3115 = vset.pattern.permute.xlu0 6
          %3116 = vperm.xlu0 %3115, %v200
          %v3117 = vpop.permute.xlu0 %3116
          %3119 = vset.pattern.permute.xlu0 6
          %3120 = vperm.xlu0 %3119, %v201
          %v3121 = vpop.permute.xlu0 %3120
          %3123 = vset.pattern.permute.xlu0 6
          %3124 = vperm.xlu0 %3123, %v202
          %v3125 = vpop.permute.xlu0 %3124
          %3127 = vset.pattern.permute.xlu0 6
          %3128 = vperm.xlu0 %3127, %v203
          %v3129 = vpop.permute.xlu0 %3128
          %3131 = vset.pattern.permute.xlu0 6
          %3132 = vperm.xlu0 %3131, %v204
          %v3133 = vpop.permute.xlu0 %3132
          %3135 = vset.pattern.permute.xlu0 6
          %3136 = vperm.xlu0 %3135, %v205
          %v3137 = vpop.permute.xlu0 %3136
          %3139 = vset.pattern.permute.xlu0 6
          %3140 = vperm.xlu0 %3139, %v206
          %v3141 = vpop.permute.xlu0 %3140
          %3143 = vset.pattern.permute.xlu0 6
          %3144 = vperm.xlu0 %3143, %v207
          %v3145 = vpop.permute.xlu0 %3144
          %3147 = vset.pattern.permute.xlu0 6
          %3148 = vperm.xlu0 %3147, %v208
          %v3149 = vpop.permute.xlu0 %3148
          %3151 = vset.pattern.permute.xlu0 6
          %3152 = vperm.xlu0 %3151, %v209
          %v3153 = vpop.permute.xlu0 %3152
          %3155 = vset.pattern.permute.xlu0 6
          %3156 = vperm.xlu0 %3155, %v210
          %v3157 = vpop.permute.xlu0 %3156
          %3159 = vset.pattern.permute.xlu0 6
          %3160 = vperm.xlu0 %3159, %v211
          %v3161 = vpop.permute.xlu0 %3160
          %3163 = vset.pattern.permute.xlu0 6
          %3164 = vperm.xlu0 %3163, %v212
          %v3165 = vpop.permute.xlu0 %3164
          %3167 = vset.pattern.permute.xlu0 6
          %3168 = vperm.xlu0 %3167, %v213
          %v3169 = vpop.permute.xlu0 %3168
          %3171 = vset.pattern.permute.xlu0 6
          %3172 = vperm.xlu0 %3171, %v214
          %v3173 = vpop.permute.xlu0 %3172
          %v3175 = vmul.f32 %v3095, %v3113
          %v3176 = vmul.f32 %v3096, %v3117
          %v3177 = vmul.f32 %v3097, %v3121
          %v3178 = vmul.f32 %v3098, %v3125
          %v3179 = vmul.f32 %v3099, %v3129
          %v3180 = vmul.f32 %v3100, %v3133
          %v3181 = vmul.f32 %v3101, %v3137
          %v3182 = vmul.f32 %v3102, %v3141
          %v3183 = vmul.f32 %v3103, %v3145
          %v3184 = vmul.f32 %v3104, %v3149
          %v3185 = vmul.f32 %v3105, %v3153
          %v3186 = vmul.f32 %v3106, %v3157
          %v3187 = vmul.f32 %v3107, %v3161
          %v3188 = vmul.f32 %v3108, %v3165
          %v3189 = vmul.f32 %v3109, %v3169
          %v3190 = vmul.f32 %v3110, %v3173
          %v3191 = vadd.f32 %v3175, %v3176
          %v3192 = vadd.f32 %v3191, %v3177
          %v3193 = vadd.f32 %v3192, %v3178
          %v3194 = vadd.f32 %v3193, %v3179
          %v3195 = vadd.f32 %v3194, %v3180
          %v3196 = vadd.f32 %v3195, %v3181
          %v3197 = vadd.f32 %v3196, %v3182
          %v3198 = vadd.f32 %v3197, %v3183
          %v3199 = vadd.f32 %v3198, %v3184
          %v3200 = vadd.f32 %v3199, %v3185
          %v3201 = vadd.f32 %v3200, %v3186
          %v3202 = vadd.f32 %v3201, %v3187
          %v3203 = vadd.f32 %v3202, %v3188
          %v3204 = vadd.f32 %v3203, %v3189
          %v3205 = vadd.f32 %v3204, %v3190
          %v3206 = vrot.slane %v3205, 4
          %v3207 = vadd.f32 %v3205, %v3206
          %v3208 = vrot.slane %v3207, 2
          %v3209 = vadd.f32 %v3207, %v3208
          %v3210 = vrot.slane %v3209, 1
          %v3211 = vadd.f32 %v3209, %v3210
          %3212 = vset.pattern.permute.xlu0 7
          %3213 = vperm.xlu0 %3212, %v199
          %v3214 = vpop.permute.xlu0 %3213
          %v3216 = vadd.f32 %v3211, %v3214
          %3217 = vst [vmem:[#allocation3] sm:$0x1] %v3216
        $region60: #{tpu_custom_call.1} parent=35 // pred_fallthru
          _
        // Predicated region
        $region61: #{tpu_custom_call.1} parent=35 // pred_check
          %p3218 = pneg %p135
        $region62: #{tpu_custom_call.1} parent=35 // pred_check_branch
          %3220 = sbr.rel (%p3218) target = $region64
        $region63: #{tpu_custom_call.1} parent=35 // pred_region
          %3222 = vsyncadd [#allocation4], 0
          %s3223 = scalar_lea.hbm %s4, %s21
          %s3225 = sshll.u32 [#allocation3], 4
          %s3226 = int_to_ptr.vmem [resolvable:$true] %s3225
          %s3227 = sshll.u32 %s3223, 4
          %s3228 = int_to_ptr.hbm [resolvable:$true] %s3227
          %3230 = dma.vmem_to_hbm [thread:$0]  %s3226, 16, %s3228, [#allocation4]
        $region64: #{tpu_custom_call.1} parent=35 // pred_fallthru
          _
        // Predicated region
        $region65: #{tpu_custom_call.1} parent=35 // pred_check
          %p3231 = pneg %p135
        $region66: #{tpu_custom_call.1} parent=35 // pred_check_branch
          %3233 = sbr.rel (%p3231) target = $region68
        $region67: #{tpu_custom_call.1} parent=35 // pred_region
          %3235 = dma.done [#allocation4], 16
        $region68: #{tpu_custom_call.1} parent=35 // pred_fallthru
          _
      $region36: #{tpu_custom_call.1} parent=5 // pred_fallthru
        _
      %p3236 = scmp.le.s32.totalorder 2, %s11
      // Predicated region
      $region69: #{tpu_custom_call.1} parent=5 // pred_check
        %p3237 = pneg %p3236
      $region70: #{tpu_custom_call.1} parent=5 // pred_check_branch
        %3239 = sbr.rel (%p3237) target = $region72
      $region71: #{tpu_custom_call.1} parent=5 // pred_region
        %s3240 = ssub.s32 %s11, 2
      $region72: #{tpu_custom_call.1} parent=5 // pred_fallthru
        _
    $region6: #{tpu_custom_call.1} parent=1 // loop_footer
      %s15 = sadd.s32 1, %s11
    $region7: #{tpu_custom_call.1} parent=1 // loop_footer_branch
      %10 = sbr.rel target = $region3
    $region8: #{tpu_custom_call.1} parent=1 // loop_exit
      _
    %3241 = vsyncpa [#allocation4], 1
    %s3242 = scalar_lea.sflag [#allocation4], 1
    %3243 = vsyncpa %s3242, 1

</llo_original>
